<compile_context>
chip_gen: v7x
topology: tpu7x:2x2x1
jax: 0.10.0
libtpu: 0.0.40
codegen_flags: <defaults>
</compile_context>

<pallas_src>
import functools

import jax
import jax.numpy as jnp
from jax import lax
from jax.experimental import pallas as pl
from jax.experimental.pallas import tpu as pltpu


def _round_up(x, m):
    return (x + m - 1) // m * m


def _rbm_forward_kernel(v_ref, w_ref, hb_ref, vb_ref, vgibbs_ref, h_ref, *,
                        k, approx, precision):
    """One batch tile: (2k+1) MXU matmuls + EUP sigmoids.

    v_ref / w_ref arrive already in the matmul dtype; biases are f32 and are
    added to the f32 pre-activation (sublane broadcast, no materialization).
    """
    v = v_ref[...]                       # (TB, n_vis_p)  matmul dtype
    W = w_ref[...]                       # (n_hid_p, n_vis_p) matmul dtype
    hb = hb_ref[...]                     # (1, n_hid_p) f32
    vb = vb_ref[...]                     # (1, n_vis_p) f32
    mm_dtype = W.dtype

    def sigmoid(pre_f32):
        # exp and reciprocal both live in the EUP slot; approx reciprocal is
        # essentially free on the bf16 path.  Numerically safe for any pre
        # (exp(+inf) -> inf -> 1/inf -> 0; exp(-inf) -> 0 -> 1/1 -> 1).
        e = jnp.exp(-pre_f32)
        return pl.reciprocal(1.0 + e, approx=approx)

    def prop_forward(vis):
        # vis @ W.T + h_bias -> (TB, n_hid_p); contract vis[-1] with W[-1].
        pre = lax.dot_general(
            vis, W, (((1,), (1,)), ((), ())),
            preferred_element_type=jnp.float32, precision=precision)
        return sigmoid(pre + hb).astype(mm_dtype)

    def prop_backward(hid):
        # hid @ W + v_bias -> (TB, n_vis_p).
        pre = jnp.dot(hid, W, preferred_element_type=jnp.float32,
                      precision=precision)
        return sigmoid(pre + vb).astype(mm_dtype)

    h = prop_forward(v)
    # k >= 1: first Gibbs step unrolled, remaining steps in a fori_loop so the
    # kernel does not unroll (and spill) for large k.
    v_gibbs = prop_backward(h)
    h = prop_forward(v_gibbs)
    if k > 1:
        def body(_, carry):
            vg, hh = carry
            vg = prop_backward(hh)
            hh = prop_forward(vg)
            return (vg, hh)
        v_gibbs, h = lax.fori_loop(1, k, body, (v_gibbs, h))

    vgibbs_ref[...] = v_gibbs.astype(vgibbs_ref.dtype)
    h_ref[...] = h.astype(h_ref.dtype)


def _pad_cast_2d(x, rows, cols, dtype):
    """Cast then zero-pad a 2-D array; no-op (beyond the cast) if aligned."""
    x = x.astype(dtype)
    r, c = x.shape
    if (r, c) != (rows, cols):
        x = jnp.pad(x, ((0, rows - r), (0, cols - c)))
    return x


def rbm_forward(v, W, h_bias, v_bias, *, k=1, tile_b=256,
                matmul_dtype=jnp.bfloat16, out_dtype=None):
    """Pallas-backed RBM.forward. Returns (v, v_gibbs, h) like the nn.Module.

    matmul_dtype=bf16 (default): bf16 W/v DMAs, bf16 activation carries and
    bf16 outputs with f32 MXU accumulation.  matmul_dtype=f32 keeps everything
    f32 (HIGHEST-precision matmuls) for tight-tolerance validation.
    """
    assert k >= 1, "RBM forward requires at least one Gibbs step (k >= 1)."
    if out_dtype is None:
        out_dtype = matmul_dtype

    h_bias = jnp.asarray(h_bias).reshape(1, -1)
    v_bias = jnp.asarray(v_bias).reshape(1, -1)
    B, n_vis = v.shape
    n_hid = W.shape[0]

    # Lane-dense padding: features to multiples of 128 (unmasked vst stores),
    # batch to the tile.  Zero-padded W rows/cols + zero biases leave the real
    # output rows/cols exact; padded entries are sliced off below.
    n_vis_p = _round_up(n_vis, 128)
    n_hid_p = _round_up(n_hid, 128)

    # Pick the batch tile: big enough to fill the 256x256 MXU on v6e/v7x, but
    # always >= 2 grid tiles when B allows so v7x's second TensorCore gets work
    # (dimension_semantics=("parallel",) shards the grid across cores).
    if B >= 16:
        tb = min(tile_b, _round_up((B + 1) // 2, 8))
    else:
        tb = min(tile_b, _round_up(max(B, 1), 8))
    b_p = _round_up(B, tb)
    num_tiles = b_p // tb

    v_p = _pad_cast_2d(v, b_p, n_vis_p, matmul_dtype)
    w_p = _pad_cast_2d(W, n_hid_p, n_vis_p, matmul_dtype)
    hb_p = _pad_cast_2d(h_bias, 1, n_hid_p, jnp.float32)
    vb_p = _pad_cast_2d(v_bias, 1, n_vis_p, jnp.float32)

    precision = (lax.Precision.HIGHEST if matmul_dtype == jnp.float32
                 else lax.Precision.DEFAULT)
    kernel = functools.partial(
        _rbm_forward_kernel, k=k,
        approx=(matmul_dtype != jnp.float32), precision=precision)

    mm_bytes = jnp.dtype(matmul_dtype).itemsize
    out_bytes = jnp.dtype(out_dtype).itemsize

    # VMEM budget: W (count 2 buffers, conservative), double-buffered v tile
    # and output tiles, plus f32 temporaries inside the body.  Capped at
    # 64 MiB so the same config is safe on v7x (half of v5e/v6e physical VMEM).
    vmem_needed = int(
        2 * n_hid_p * n_vis_p * mm_bytes
        + 2 * tb * n_vis_p * mm_bytes
        + 2 * tb * (n_vis_p + n_hid_p) * out_bytes
        + 4 * tb * (n_vis_p + n_hid_p) * 4
        + 2 * (n_hid_p + n_vis_p) * 4)
    vmem_limit = min(64 * 1024 * 1024, max(32 * 1024 * 1024,
                                           int(vmem_needed * 1.25)))
    # TODO(synk): for very large W (> ~32 MiB in matmul dtype) add a K-tiled
    # "arbitrary" grid axis with a VMEM accumulator instead of a resident W.

    flops = 2 * (2 * k + 1) * b_p * n_vis_p * n_hid_p
    transcendentals = 2 * ((k + 1) * b_p * n_hid_p + k * b_p * n_vis_p)
    bytes_accessed = (mm_bytes * (b_p * n_vis_p + n_hid_p * n_vis_p)
                      + out_bytes * b_p * (n_vis_p + n_hid_p)
                      + 4 * (n_hid_p + n_vis_p))

    v_gibbs_p, h_p = pl.pallas_call(
        kernel,
        out_shape=(
            jax.ShapeDtypeStruct((b_p, n_vis_p), out_dtype),
            jax.ShapeDtypeStruct((b_p, n_hid_p), out_dtype),
        ),
        grid=(num_tiles,),
        in_specs=[
            # Batch-tiled activations: double-buffered by the pipeline.
            pl.BlockSpec((tb, n_vis_p), lambda i: (i, 0)),
            # Weights / biases: constant index_map -> stay VMEM-resident.
            pl.BlockSpec((n_hid_p, n_vis_p), lambda i: (0, 0)),
            pl.BlockSpec((1, n_hid_p), lambda i: (0, 0)),
            pl.BlockSpec((1, n_vis_p), lambda i: (0, 0)),
        ],
        out_specs=(
            pl.BlockSpec((tb, n_vis_p), lambda i: (i, 0)),
            pl.BlockSpec((tb, n_hid_p), lambda i: (i, 0)),
        ),
        compiler_params=pltpu.CompilerParams(
            dimension_semantics=("parallel",),   # megacore sharding on v7x
            vmem_limit_bytes=vmem_limit,
        ),
        cost_estimate=pl.CostEstimate(
            flops=int(flops),
            transcendentals=int(transcendentals),
            bytes_accessed=int(bytes_accessed),
        ),
    )(v_p, w_p, hb_p, vb_p)

    v_gibbs = v_gibbs_p[:B, :n_vis]
    h = h_p[:B, :n_hid]
    return v, v_gibbs, h


def rbm_forward_ref(v, W, h_bias, v_bias, *, k=1):
    """Pure-JAX (f32) reference mirroring the PyTorch module."""
    def prop_forward(vis):
        return jax.nn.sigmoid(vis @ W.T + h_bias)

    def prop_backward(hid):
        return jax.nn.sigmoid(hid @ W + v_bias)

    h = prop_forward(v)
    for _ in range(k):
        v_gibbs = prop_backward(h)
        h = prop_forward(v_gibbs)
    return v, v_gibbs, h


def _check(got, want, atol, rtol, tag):
    for g, w in zip(got, want):
        g = jnp.asarray(g, jnp.float32)
        w = jnp.asarray(w, jnp.float32)
        assert jnp.allclose(g, w, atol=atol, rtol=rtol), (
            f"{tag}: max abs diff {jnp.max(jnp.abs(g - w))}")


if __name__ == "__main__":
    key = jax.random.PRNGKey(0)
    k_v, k_w, k_hb, k_vb, k_v2, k_w2 = jax.random.split(key, 6)

    # --- Config A: lane-aligned small shapes, k=1 ------------------------
    B, n_vis, n_hid, gibbs_k = 8, 256, 128, 1
    W = jax.random.normal(k_w, (n_hid, n_vis), dtype=jnp.float32)
    h_bias = jax.random.normal(k_hb, (1, n_hid), dtype=jnp.float32)
    v_bias = jax.random.normal(k_vb, (1, n_vis), dtype=jnp.float32)
    v = jax.random.uniform(k_v, (B, n_vis), dtype=jnp.float32)

    ref = rbm_forward_ref(v, W, h_bias, v_bias, k=gibbs_k)

    # f32 matmul path (HIGHEST precision): tight tolerance.
    out_f32 = rbm_forward(v, W, h_bias, v_bias, k=gibbs_k,
                          matmul_dtype=jnp.float32)
    jax.block_until_ready(out_f32)
    _check(out_f32, ref, atol=1e-5, rtol=1e-5, tag="A/f32")

    # bf16 I/O + MXU path (default, memory-bound friendly): loose tolerance.
    out_bf16 = rbm_forward(v, W, h_bias, v_bias, k=gibbs_k)
    jax.block_until_ready(out_bf16)
    _check(out_bf16, ref, atol=1e-1, rtol=1e-1, tag="A/bf16")

    # --- Config B: module-default feature size (784 -> padded to 896), k=2 --
    B2, n_vis2, n_hid2, gibbs_k2 = 8, 784, 128, 2
    W2 = jax.random.normal(k_w2, (n_hid2, n_vis2), dtype=jnp.float32)
    h_bias2 = jax.random.normal(k_hb, (1, n_hid2), dtype=jnp.float32)
    v_bias2 = jax.random.normal(k_vb, (1, n_vis2), dtype=jnp.float32)
    v2 = jax.random.uniform(k_v2, (B2, n_vis2), dtype=jnp.float32)

    ref2 = rbm_forward_ref(v2, W2, h_bias2, v_bias2, k=gibbs_k2)
    out2 = rbm_forward(v2, W2, h_bias2, v_bias2, k=gibbs_k2,
                       matmul_dtype=jnp.float32)
    jax.block_until_ready(out2)
    _check(out2, ref2, atol=1e-5, rtol=1e-5, tag="B/f32-padded")

    out2_bf16 = rbm_forward(v2, W2, h_bias2, v_bias2, k=gibbs_k2)
    jax.block_until_ready(out2_bf16)
    _check(out2_bf16, ref2, atol=1e-1, rtol=1e-1, tag="B/bf16-padded")

    print("KERNEL_OK")
</pallas_src>

<mosaic_0001>
module attributes {stable_mosaic.version = 11 : i64} {
  func.func @_rbm_forward_kernel(%arg0: i32, %arg1: memref<8x256xf32, #tpu.memory_space<vmem>>, %arg2: memref<128x256xf32, #tpu.memory_space<vmem>>, %arg3: memref<1x128xf32, #tpu.memory_space<vmem>>, %arg4: memref<1x256xf32, #tpu.memory_space<vmem>>, %arg5: memref<8x256xf32, #tpu.memory_space<vmem>>, %arg6: memref<8x128xf32, #tpu.memory_space<vmem>>) attributes {dimension_semantics = [#tpu.dimension_semantics<parallel>], iteration_bounds = array<i64: 1>, scalar_prefetch = 0 : i64, scratch_operands = 0 : i64, tpu.core_type = #tpu.core_type<tc>, window_params = [{transform_indices = @transform_0, window_bounds = array<i64: 8, 256>}, {pipeline_mode = #tpu.pipeline_mode<synchronous>, transform_indices = @transform_1, window_bounds = array<i64: 128, 256>}, {pipeline_mode = #tpu.pipeline_mode<synchronous>, transform_indices = @transform_2, window_bounds = array<i64: 1, 128>}, {pipeline_mode = #tpu.pipeline_mode<synchronous>, transform_indices = @transform_3, window_bounds = array<i64: 1, 256>}, {transform_indices = @transform_4, window_bounds = array<i64: 8, 256>}, {transform_indices = @transform_5, window_bounds = array<i64: 8, 128>}]} {
    %c0 = arith.constant 0 : index
    %c0_0 = arith.constant 0 : index
    %0 = vector.load %arg1[%c0, %c0_0] : memref<8x256xf32, #tpu.memory_space<vmem>>, vector<8x256xf32>
    %c0_1 = arith.constant 0 : index
    %c0_2 = arith.constant 0 : index
    %1 = vector.load %arg2[%c0_1, %c0_2] : memref<128x256xf32, #tpu.memory_space<vmem>>, vector<128x256xf32>
    %c0_3 = arith.constant 0 : index
    %c0_4 = arith.constant 0 : index
    %2 = vector.load %arg3[%c0_3, %c0_4] : memref<1x128xf32, #tpu.memory_space<vmem>>, vector<1x128xf32>
    %c0_5 = arith.constant 0 : index
    %c0_6 = arith.constant 0 : index
    %3 = vector.load %arg4[%c0_5, %c0_6] : memref<1x256xf32, #tpu.memory_space<vmem>>, vector<1x256xf32>
    %cst = arith.constant dense<0.000000e+00> : vector<8x128xf32>
    %4 = tpu.matmul %0, %1, %cst {dimension_numbers = #tpu.dot_dimension_numbers<[1], [1], [0], [0], [0, 0, 1, 0], [], []>, precision = #tpu.contract_precision<fp32>} : vector<8x256xf32>, vector<128x256xf32>, vector<8x128xf32> -> vector<8x128xf32>
    %5 = vector.broadcast %2 : vector<1x128xf32> to vector<8x128xf32>
    %6 = arith.addf %4, %5 : vector<8x128xf32>
    %cst_7 = arith.constant 0.000000e+00 : f32
    %7 = vector.broadcast %cst_7 : f32 to vector<8x128xf32>
    %8 = arith.subf %7, %6 : vector<8x128xf32>
    %9 = math.exp %8 : vector<8x128xf32>
    %cst_8 = arith.constant 1.000000e+00 : f32
    %10 = vector.broadcast %cst_8 : f32 to vector<8x128xf32>
    %11 = arith.addf %10, %9 : vector<8x128xf32>
    %12 = tpu.reciprocal %11 : vector<8x128xf32> -> vector<8x128xf32>
    %cst_9 = arith.constant dense<0.000000e+00> : vector<8x256xf32>
    %13 = tpu.matmul %12, %1, %cst_9 {dimension_numbers = #tpu.dot_dimension_numbers<[1], [0], [0], [1], [0, 0, 1, 1], [], []>, precision = #tpu.contract_precision<fp32>} : vector<8x128xf32>, vector<128x256xf32>, vector<8x256xf32> -> vector<8x256xf32>
    %14 = vector.broadcast %3 : vector<1x256xf32> to vector<8x256xf32>
    %15 = arith.addf %13, %14 : vector<8x256xf32>
    %cst_10 = arith.constant 0.000000e+00 : f32
    %16 = vector.broadcast %cst_10 : f32 to vector<8x256xf32>
    %17 = arith.subf %16, %15 : vector<8x256xf32>
    %18 = math.exp %17 : vector<8x256xf32>
    %cst_11 = arith.constant 1.000000e+00 : f32
    %19 = vector.broadcast %cst_11 : f32 to vector<8x256xf32>
    %20 = arith.addf %19, %18 : vector<8x256xf32>
    %21 = tpu.reciprocal %20 : vector<8x256xf32> -> vector<8x256xf32>
    %cst_12 = arith.constant dense<0.000000e+00> : vector<8x128xf32>
    %22 = tpu.matmul %21, %1, %cst_12 {dimension_numbers = #tpu.dot_dimension_numbers<[1], [1], [0], [0], [0, 0, 1, 0], [], []>, precision = #tpu.contract_precision<fp32>} : vector<8x256xf32>, vector<128x256xf32>, vector<8x128xf32> -> vector<8x128xf32>
    %23 = vector.broadcast %2 : vector<1x128xf32> to vector<8x128xf32>
    %24 = arith.addf %22, %23 : vector<8x128xf32>
    %cst_13 = arith.constant 0.000000e+00 : f32
    %25 = vector.broadcast %cst_13 : f32 to vector<8x128xf32>
    %26 = arith.subf %25, %24 : vector<8x128xf32>
    %27 = math.exp %26 : vector<8x128xf32>
    %cst_14 = arith.constant 1.000000e+00 : f32
    %28 = vector.broadcast %cst_14 : f32 to vector<8x128xf32>
    %29 = arith.addf %28, %27 : vector<8x128xf32>
    %30 = tpu.reciprocal %29 : vector<8x128xf32> -> vector<8x128xf32>
    %c0_15 = arith.constant 0 : index
    %c0_16 = arith.constant 0 : index
    %31 = vector.load %arg5[%c0_15, %c0_16] : memref<8x256xf32, #tpu.memory_space<vmem>>, vector<8x256xf32>
    tpu.vector_store %arg5[%c0_15, %c0_16], %21 {strides = array<i32>} : memref<8x256xf32, #tpu.memory_space<vmem>>, vector<8x256xf32>,
    %c0_17 = arith.constant 0 : index
    %c0_18 = arith.constant 0 : index
    %32 = vector.load %arg6[%c0_17, %c0_18] : memref<8x128xf32, #tpu.memory_space<vmem>>, vector<8x128xf32>
    tpu.vector_store %arg6[%c0_17, %c0_18], %30 {strides = array<i32>} : memref<8x128xf32, #tpu.memory_space<vmem>>, vector<8x128xf32>,
    return
  }
  func.func @transform_0(%arg0: i32) -> (i32, i32) {
    %c0_i32 = arith.constant 0 : i32
    %c0_i32_0 = arith.constant 0 : i32
    return %arg0, %c0_i32 : i32, i32
  }
  func.func @transform_1(%arg0: i32) -> (i32, i32) {
    %c0_i32 = arith.constant 0 : i32
    %c0_i32_0 = arith.constant 0 : i32
    %c0_i32_1 = arith.constant 0 : i32
    return %c0_i32, %c0_i32_0 : i32, i32
  }
  func.func @transform_2(%arg0: i32) -> (i32, i32) {
    %c0_i32 = arith.constant 0 : i32
    %c0_i32_0 = arith.constant 0 : i32
    %c0_i32_1 = arith.constant 0 : i32
    return %c0_i32, %c0_i32_0 : i32, i32
  }
  func.func @transform_3(%arg0: i32) -> (i32, i32) {
    %c0_i32 = arith.constant 0 : i32
    %c0_i32_0 = arith.constant 0 : i32
    %c0_i32_1 = arith.constant 0 : i32
    return %c0_i32, %c0_i32_0 : i32, i32
  }
  func.func @transform_4(%arg0: i32) -> (i32, i32) {
    %c0_i32 = arith.constant 0 : i32
    %c0_i32_0 = arith.constant 0 : i32
    return %arg0, %c0_i32 : i32, i32
  }
  func.func @transform_5(%arg0: i32) -> (i32, i32) {
    %c0_i32 = arith.constant 0 : i32
    %c0_i32_0 = arith.constant 0 : i32
    return %arg0, %c0_i32 : i32, i32
  }
}

</mosaic_0001>

<llo_original>
// kernel: tpu_custom_call.1
$region0: #{tpu_custom_call.1}
  #allocation0 [shape = 'u32[]', space=smem, size = 0x4, offset = 0x4, fixed_abs, tag = 'smem constant byte address 0x4 - core index']
  #allocation1 [shape = 'u32[144,128]{1,0:T(1,128)}', space=vmem, size = 0x12000, scoped, tag = 'internal scratch']
  %s0 = inlined_call_operand.hbm [shape: f32[8,256], index: 0, kind: input, shape index: {}]
  %s1 = inlined_call_operand.hbm [shape: f32[128,256], index: 1, kind: input, shape index: {}]
  %s2 = inlined_call_operand.vmem [shape: f32[1,128], index: 2, kind: input, shape index: {}]
  %s3 = inlined_call_operand.vmem [shape: f32[1,256], index: 3, kind: input, shape index: {}]
  %s4 = inlined_call_operand.hbm [shape: f32[8,256], index: 4, kind: output, shape index: {0}]
  %s5 = inlined_call_operand.hbm [shape: f32[8,128], index: 5, kind: output, shape index: {1}]
  %6 = xla_tuple %s4, %s5
  %s7 = sld [smem:[#allocation0]]
  $region42: #{tpu_custom_call.1} parent=0
    _
  %s9 = ssub.s32 1, %s7
  %s10 = scalar_select 0, %s9, %s7
  $region1: #{tpu_custom_call.1} parent=0
    #allocation2 [shape = 'u8[8192]{0}', space=vmem, size = 0x2000, scoped, tag = 'input window, operand 0, single buffered']
    #allocation3 [shape = 's32[1]{0}', space=sflag, size = 0x4, scoped, tag = 'scoped memory for tpu_custom_call.1']
    #allocation4 [shape = 's32[1]{0}', space=sflag, size = 0x4, scoped, tag = 'scoped memory for tpu_custom_call.1']
    #allocation5 [shape = 'u8[131072]{0}', space=vmem, size = 0x20000, scoped, tag = 'input window, operand 1, single buffered']
    #allocation6 [shape = 's32[1]{0}', space=sflag, size = 0x4, scoped, tag = 'scoped memory for tpu_custom_call.1']
    #allocation7 [shape = 'u8[8192]{0}', space=vmem, size = 0x2000, scoped, tag = 'output window, operand 0, single buffered']
    #allocation8 [shape = 'u8[4096]{0}', space=vmem, size = 0x1000, scoped, tag = 'output window, operand 1, single buffered']
    #allocation9 [shape = 's32[1]{0}', space=sflag, size = 0x4, scoped, tag = 'scoped memory for tpu_custom_call.1']
    %11 = vsyncpa [#allocation3], 0
    %12 = vsyncpa [#allocation6], 0
    %13 = vsyncpa [#allocation4], 0
    %14 = vsyncpa [#allocation9], 0
    // Predicated region
    $region2: #{tpu_custom_call.1} parent=1 // pred_check
      _
    $region3: #{tpu_custom_call.1} parent=1 // pred_check_branch
      %16 = sbr.rel (0) target = $region5
    $region4: #{tpu_custom_call.1} parent=1 // pred_region
      %s18 = ssub.s32 256, 256
      %19 = vsyncadd [#allocation3], %s18
      %s21 = sshll.u32 [#allocation2], 4
      %s22 = int_to_ptr.vmem [resolvable:$true] %s21
      %24 = dma.hbm_to_vmem [thread:$0]  %s0, 256, %s22, [#allocation3]
    $region5: #{tpu_custom_call.1} parent=1 // pred_fallthru
      _
    // Predicated region
    $region6: #{tpu_custom_call.1} parent=1 // pred_check
      _
    $region7: #{tpu_custom_call.1} parent=1 // pred_check_branch
      %26 = sbr.rel (0) target = $region9
    $region8: #{tpu_custom_call.1} parent=1 // pred_region
      %s28 = ssub.s32 4096, 4096
      %29 = vsyncadd [#allocation6], %s28
      %s30 = sshll.u32 [#allocation5], 4
      %s31 = int_to_ptr.vmem [resolvable:$true] %s30
      %36 = dma.hbm_to_vmem [thread:$0]  %s1, 4096, %s31, [#allocation6], 256, 256, 16
    $region9: #{tpu_custom_call.1} parent=1 // pred_fallthru
      _
    // Predicated region
    $region10: #{tpu_custom_call.1} parent=1 // pred_check
      _
    $region11: #{tpu_custom_call.1} parent=1 // pred_check_branch
      %38 = sbr.rel (0) target = $region13
    $region12: #{tpu_custom_call.1} parent=1 // pred_region
      _
    $region13: #{tpu_custom_call.1} parent=1 // pred_fallthru
      _
    // Predicated region
    $region14: #{tpu_custom_call.1} parent=1 // pred_check
      _
    $region15: #{tpu_custom_call.1} parent=1 // pred_check_branch
      %40 = sbr.rel (0) target = $region17
    $region16: #{tpu_custom_call.1} parent=1 // pred_region
      _
    $region17: #{tpu_custom_call.1} parent=1 // pred_fallthru
      _
    // Predicated region
    $region18: #{tpu_custom_call.1} parent=1 // pred_check
      _
    $region19: #{tpu_custom_call.1} parent=1 // pred_check_branch
      %42 = sbr.rel (0) target = $region21
    $region20: #{tpu_custom_call.1} parent=1 // pred_region
      %43 = dma.done [#allocation3], 256
    $region21: #{tpu_custom_call.1} parent=1 // pred_fallthru
      _
    // Predicated region
    $region22: #{tpu_custom_call.1} parent=1 // pred_check
      _
    $region23: #{tpu_custom_call.1} parent=1 // pred_check_branch
      %45 = sbr.rel (0) target = $region25
    $region24: #{tpu_custom_call.1} parent=1 // pred_region
      %46 = dma.done [#allocation6], 4096
    $region25: #{tpu_custom_call.1} parent=1 // pred_fallthru
      _
    %v47 = vld [vmem:[#allocation2] sm:$0xff]
    %v48 = vld [vmem:[#allocation2 + $0x8] sm:$0xff]
    %v49 = vld [vmem:[#allocation5] sm:$0xff]
    %v50 = vld [vmem:[#allocation5 + $0x8] sm:$0xff]
    %v51 = vld [vmem:[#allocation5 + $0x10] sm:$0xff]
    %v52 = vld [vmem:[#allocation5 + $0x18] sm:$0xff]
    %v53 = vld [vmem:[#allocation5 + $0x20] sm:$0xff]
    %v54 = vld [vmem:[#allocation5 + $0x28] sm:$0xff]
    %v55 = vld [vmem:[#allocation5 + $0x30] sm:$0xff]
    %v56 = vld [vmem:[#allocation5 + $0x38] sm:$0xff]
    %v57 = vld [vmem:[#allocation5 + $0x40] sm:$0xff]
    %v58 = vld [vmem:[#allocation5 + $0x48] sm:$0xff]
    %v59 = vld [vmem:[#allocation5 + $0x50] sm:$0xff]
    %v60 = vld [vmem:[#allocation5 + $0x58] sm:$0xff]
    %v61 = vld [vmem:[#allocation5 + $0x60] sm:$0xff]
    %v62 = vld [vmem:[#allocation5 + $0x68] sm:$0xff]
    %v63 = vld [vmem:[#allocation5 + $0x70] sm:$0xff]
    %v64 = vld [vmem:[#allocation5 + $0x78] sm:$0xff]
    %v65 = vld [vmem:[#allocation5 + $0x80] sm:$0xff]
    %v66 = vld [vmem:[#allocation5 + $0x88] sm:$0xff]
    %v67 = vld [vmem:[#allocation5 + $0x90] sm:$0xff]
    %v68 = vld [vmem:[#allocation5 + $0x98] sm:$0xff]
    %v69 = vld [vmem:[#allocation5 + $0xa0] sm:$0xff]
    %v70 = vld [vmem:[#allocation5 + $0xa8] sm:$0xff]
    %v71 = vld [vmem:[#allocation5 + $0xb0] sm:$0xff]
    %v72 = vld [vmem:[#allocation5 + $0xb8] sm:$0xff]
    %v73 = vld [vmem:[#allocation5 + $0xc0] sm:$0xff]
    %v74 = vld [vmem:[#allocation5 + $0xc8] sm:$0xff]
    %v75 = vld [vmem:[#allocation5 + $0xd0] sm:$0xff]
    %v76 = vld [vmem:[#allocation5 + $0xd8] sm:$0xff]
    %v77 = vld [vmem:[#allocation5 + $0xe0] sm:$0xff]
    %v78 = vld [vmem:[#allocation5 + $0xe8] sm:$0xff]
    %v79 = vld [vmem:[#allocation5 + $0xf0] sm:$0xff]
    %v80 = vld [vmem:[#allocation5 + $0xf8] sm:$0xff]
    %v81 = vld [vmem:[%s2] sm:$0x1]
    %v82 = vld [vmem:[%s3] sm:$0x3]
    %v84 = vlaneseq
    %v85 = vshrl.u32 %v84, 7
    %v86 = vsub.s32 0, %v85
    %v87 = vrot.slane %v81, %v86
    %v89 = vand.u32 %v50, 4294901760
    %90 = vmatprep.subr.mxu0 %v89
    %v91 = vand.u32 %v49, 4294901760
    %92 = vmatpush1.xpose.msra.mxu0 %v91
    %v93 = vand.u32 %v52, 4294901760
    %94 = vmatprep.subr.mxu0 %v93
    %v95 = vand.u32 %v51, 4294901760
    %96 = vmatpush1.xpose.msra.mxu0 %v95
    %v97 = vand.u32 %v54, 4294901760
    %98 = vmatprep.subr.mxu0 %v97
    %v99 = vand.u32 %v53, 4294901760
    %100 = vmatpush1.xpose.msra.mxu0 %v99
    %v101 = vand.u32 %v56, 4294901760
    %102 = vmatprep.subr.mxu0 %v101
    %v103 = vand.u32 %v55, 4294901760
    %104 = vmatpush1.xpose.msra.mxu0 %v103
    %v105 = vand.u32 %v58, 4294901760
    %106 = vmatprep.subr.mxu0 %v105
    %v107 = vand.u32 %v57, 4294901760
    %108 = vmatpush1.xpose.msra.mxu0 %v107
    %v109 = vand.u32 %v60, 4294901760
    %110 = vmatprep.subr.mxu0 %v109
    %v111 = vand.u32 %v59, 4294901760
    %112 = vmatpush1.xpose.msra.mxu0 %v111
    %v113 = vand.u32 %v62, 4294901760
    %114 = vmatprep.subr.mxu0 %v113
    %v115 = vand.u32 %v61, 4294901760
    %116 = vmatpush1.xpose.msra.mxu0 %v115
    %v117 = vand.u32 %v64, 4294901760
    %118 = vmatprep.subr.mxu0 %v117
    %v119 = vand.u32 %v63, 4294901760
    %120 = vmatpush1.xpose.msra.mxu0 %v119
    %v121 = vand.u32 %v66, 4294901760
    %122 = vmatprep.subr.mxu0 %v121
    %v123 = vand.u32 %v65, 4294901760
    %124 = vmatpush1.xpose.msra.mxu0 %v123
    %v125 = vand.u32 %v68, 4294901760
    %126 = vmatprep.subr.mxu0 %v125
    %v127 = vand.u32 %v67, 4294901760
    %128 = vmatpush1.xpose.msra.mxu0 %v127
    %v129 = vand.u32 %v70, 4294901760
    %130 = vmatprep.subr.mxu0 %v129
    %v131 = vand.u32 %v69, 4294901760
    %132 = vmatpush1.xpose.msra.mxu0 %v131
    %v133 = vand.u32 %v72, 4294901760
    %134 = vmatprep.subr.mxu0 %v133
    %v135 = vand.u32 %v71, 4294901760
    %136 = vmatpush1.xpose.msra.mxu0 %v135
    %v137 = vand.u32 %v74, 4294901760
    %138 = vmatprep.subr.mxu0 %v137
    %v139 = vand.u32 %v73, 4294901760
    %140 = vmatpush1.xpose.msra.mxu0 %v139
    %v141 = vand.u32 %v76, 4294901760
    %142 = vmatprep.subr.mxu0 %v141
    %v143 = vand.u32 %v75, 4294901760
    %144 = vmatpush1.xpose.msra.mxu0 %v143
    %v145 = vand.u32 %v78, 4294901760
    %146 = vmatprep.subr.mxu0 %v145
    %v147 = vand.u32 %v77, 4294901760
    %148 = vmatpush1.xpose.msra.mxu0 %v147
    %v149 = vand.u32 %v80, 4294901760
    %150 = vmatprep.subr.mxu0 %v149
    %v151 = vand.u32 %v79, 4294901760
    %152 = vmatpush1.xpose.msra.mxu0 %v151
    %153 = vmatprep.subr.mxu0 0.0
    %154 = vmatpush1.xpose.msra.mxu0 0.0
    %155 = vmatprep.subr.mxu0 0.0
    %156 = vmatpush1.xpose.msra.mxu0 0.0
    %157 = vmatprep.subr.mxu0 0.0
    %158 = vmatpush1.xpose.msra.mxu0 0.0
    %159 = vmatprep.subr.mxu0 0.0
    %160 = vmatpush1.xpose.msra.mxu0 0.0
    %161 = vmatprep.subr.mxu0 0.0
    %162 = vmatpush1.xpose.msra.mxu0 0.0
    %163 = vmatprep.subr.mxu0 0.0
    %164 = vmatpush1.xpose.msra.mxu0 0.0
    %165 = vmatprep.subr.mxu0 0.0
    %166 = vmatpush1.xpose.msra.mxu0 0.0
    %167 = vmatprep.subr.mxu0 0.0
    %168 = vmatpush1.xpose.msra.mxu0 0.0
    %169 = vmatprep.subr.mxu0 0.0
    %170 = vmatpush1.xpose.msra.mxu0 0.0
    %171 = vmatprep.subr.mxu0 0.0
    %172 = vmatpush1.xpose.msra.mxu0 0.0
    %173 = vmatprep.subr.mxu0 0.0
    %174 = vmatpush1.xpose.msra.mxu0 0.0
    %175 = vmatprep.subr.mxu0 0.0
    %176 = vmatpush1.xpose.msra.mxu0 0.0
    %177 = vmatprep.subr.mxu0 0.0
    %178 = vmatpush1.xpose.msra.mxu0 0.0
    %179 = vmatprep.subr.mxu0 0.0
    %180 = vmatpush1.xpose.msra.mxu0 0.0
    %181 = vmatprep.subr.mxu0 0.0
    %182 = vmatpush1.xpose.msra.mxu0 0.0
    %183 = vmatprep.subr.mxu0 0.0
    %184 = vmatpush1.xpose.msra.mxu0 0.0
    %v185 = vand.u32 %v48, 4294901760
    %v186 = vsub.f32 %v48, %v185
    %v187 = vand.u32 %v186, 4294901760
    %v188 = vsub.f32 %v186, %v187
    %v189 = vand.u32 %v188, 4294901760
    %190 = vmatprep.mubr.f32.mxu0 %v189
    %v191 = vand.u32 %v47, 4294901760
    %v192 = vsub.f32 %v47, %v191
    %v193 = vand.u32 %v192, 4294901760
    %v194 = vsub.f32 %v192, %v193
    %v195 = vand.u32 %v194, 4294901760
    %196 = vmatmul.mubr.f32.gmra.mrb[0].mxu0 %v195
    %v197 = vpop.f32.mrb[0].mxu0
    %v198 = vadd.f32 %v87, %v197
    %v199 = vpop.f32.mrb[0].mxu0
    %200 = vdwg.mxu0
    %v201 = vand.u32 %v50, 4294901760
    %v202 = vsub.f32 %v50, %v201
    %v203 = vand.u32 %v202, 4294901760
    %v204 = vsub.f32 %v202, %v203
    %v205 = vand.u32 %v204, 4294901760
    %206 = vmatprep.subr.mxu0 %v205
    %v207 = vand.u32 %v49, 4294901760
    %v208 = vsub.f32 %v49, %v207
    %v209 = vand.u32 %v208, 4294901760
    %v210 = vsub.f32 %v208, %v209
    %v211 = vand.u32 %v210, 4294901760
    %212 = vmatpush1.xpose.msra.mxu0 %v211
    %v213 = vand.u32 %v52, 4294901760
    %v214 = vsub.f32 %v52, %v213
    %v215 = vand.u32 %v214, 4294901760
    %v216 = vsub.f32 %v214, %v215
    %v217 = vand.u32 %v216, 4294901760
    %218 = vmatprep.subr.mxu0 %v217
    %v219 = vand.u32 %v51, 4294901760
    %v220 = vsub.f32 %v51, %v219
    %v221 = vand.u32 %v220, 4294901760
    %v222 = vsub.f32 %v220, %v221
    %v223 = vand.u32 %v222, 4294901760
    %224 = vmatpush1.xpose.msra.mxu0 %v223
    %v225 = vand.u32 %v54, 4294901760
    %v226 = vsub.f32 %v54, %v225
    %v227 = vand.u32 %v226, 4294901760
    %v228 = vsub.f32 %v226, %v227
    %v229 = vand.u32 %v228, 4294901760
    %230 = vmatprep.subr.mxu0 %v229
    %v231 = vand.u32 %v53, 4294901760
    %v232 = vsub.f32 %v53, %v231
    %v233 = vand.u32 %v232, 4294901760
    %v234 = vsub.f32 %v232, %v233
    %v235 = vand.u32 %v234, 4294901760
    %236 = vmatpush1.xpose.msra.mxu0 %v235
    %v237 = vand.u32 %v56, 4294901760
    %v238 = vsub.f32 %v56, %v237
    %v239 = vand.u32 %v238, 4294901760
    %v240 = vsub.f32 %v238, %v239
    %v241 = vand.u32 %v240, 4294901760
    %242 = vmatprep.subr.mxu0 %v241
    %v243 = vand.u32 %v55, 4294901760
    %v244 = vsub.f32 %v55, %v243
    %v245 = vand.u32 %v244, 4294901760
    %v246 = vsub.f32 %v244, %v245
    %v247 = vand.u32 %v246, 4294901760
    %248 = vmatpush1.xpose.msra.mxu0 %v247
    %v249 = vand.u32 %v58, 4294901760
    %v250 = vsub.f32 %v58, %v249
    %v251 = vand.u32 %v250, 4294901760
    %v252 = vsub.f32 %v250, %v251
    %v253 = vand.u32 %v252, 4294901760
    %254 = vmatprep.subr.mxu0 %v253
    %v255 = vand.u32 %v57, 4294901760
    %v256 = vsub.f32 %v57, %v255
    %v257 = vand.u32 %v256, 4294901760
    %v258 = vsub.f32 %v256, %v257
    %v259 = vand.u32 %v258, 4294901760
    %260 = vmatpush1.xpose.msra.mxu0 %v259
    %v261 = vand.u32 %v60, 4294901760
    %v262 = vsub.f32 %v60, %v261
    %v263 = vand.u32 %v262, 4294901760
    %v264 = vsub.f32 %v262, %v263
    %v265 = vand.u32 %v264, 4294901760
    %266 = vmatprep.subr.mxu0 %v265
    %v267 = vand.u32 %v59, 4294901760
    %v268 = vsub.f32 %v59, %v267
    %v269 = vand.u32 %v268, 4294901760
    %v270 = vsub.f32 %v268, %v269
    %v271 = vand.u32 %v270, 4294901760
    %272 = vmatpush1.xpose.msra.mxu0 %v271
    %v273 = vand.u32 %v62, 4294901760
    %v274 = vsub.f32 %v62, %v273
    %v275 = vand.u32 %v274, 4294901760
    %v276 = vsub.f32 %v274, %v275
    %v277 = vand.u32 %v276, 4294901760
    %278 = vmatprep.subr.mxu0 %v277
    %v279 = vand.u32 %v61, 4294901760
    %v280 = vsub.f32 %v61, %v279
    %v281 = vand.u32 %v280, 4294901760
    %v282 = vsub.f32 %v280, %v281
    %v283 = vand.u32 %v282, 4294901760
    %284 = vmatpush1.xpose.msra.mxu0 %v283
    %v285 = vand.u32 %v64, 4294901760
    %v286 = vsub.f32 %v64, %v285
    %v287 = vand.u32 %v286, 4294901760
    %v288 = vsub.f32 %v286, %v287
    %v289 = vand.u32 %v288, 4294901760
    %290 = vmatprep.subr.mxu0 %v289
    %v291 = vand.u32 %v63, 4294901760
    %v292 = vsub.f32 %v63, %v291
    %v293 = vand.u32 %v292, 4294901760
    %v294 = vsub.f32 %v292, %v293
    %v295 = vand.u32 %v294, 4294901760
    %296 = vmatpush1.xpose.msra.mxu0 %v295
    %v297 = vand.u32 %v66, 4294901760
    %v298 = vsub.f32 %v66, %v297
    %v299 = vand.u32 %v298, 4294901760
    %v300 = vsub.f32 %v298, %v299
    %v301 = vand.u32 %v300, 4294901760
    %302 = vmatprep.subr.mxu0 %v301
    %v303 = vand.u32 %v65, 4294901760
    %v304 = vsub.f32 %v65, %v303
    %v305 = vand.u32 %v304, 4294901760
    %v306 = vsub.f32 %v304, %v305
    %v307 = vand.u32 %v306, 4294901760
    %308 = vmatpush1.xpose.msra.mxu0 %v307
    %v309 = vand.u32 %v68, 4294901760
    %v310 = vsub.f32 %v68, %v309
    %v311 = vand.u32 %v310, 4294901760
    %v312 = vsub.f32 %v310, %v311
    %v313 = vand.u32 %v312, 4294901760
    %314 = vmatprep.subr.mxu0 %v313
    %v315 = vand.u32 %v67, 4294901760
    %v316 = vsub.f32 %v67, %v315
    %v317 = vand.u32 %v316, 4294901760
    %v318 = vsub.f32 %v316, %v317
    %v319 = vand.u32 %v318, 4294901760
    %320 = vmatpush1.xpose.msra.mxu0 %v319
    %v321 = vand.u32 %v70, 4294901760
    %v322 = vsub.f32 %v70, %v321
    %v323 = vand.u32 %v322, 4294901760
    %v324 = vsub.f32 %v322, %v323
    %v325 = vand.u32 %v324, 4294901760
    %326 = vmatprep.subr.mxu0 %v325
    %v327 = vand.u32 %v69, 4294901760
    %v328 = vsub.f32 %v69, %v327
    %v329 = vand.u32 %v328, 4294901760
    %v330 = vsub.f32 %v328, %v329
    %v331 = vand.u32 %v330, 4294901760
    %332 = vmatpush1.xpose.msra.mxu0 %v331
    %v333 = vand.u32 %v72, 4294901760
    %v334 = vsub.f32 %v72, %v333
    %v335 = vand.u32 %v334, 4294901760
    %v336 = vsub.f32 %v334, %v335
    %v337 = vand.u32 %v336, 4294901760
    %338 = vmatprep.subr.mxu0 %v337
    %v339 = vand.u32 %v71, 4294901760
    %v340 = vsub.f32 %v71, %v339
    %v341 = vand.u32 %v340, 4294901760
    %v342 = vsub.f32 %v340, %v341
    %v343 = vand.u32 %v342, 4294901760
    %344 = vmatpush1.xpose.msra.mxu0 %v343
    %v345 = vand.u32 %v74, 4294901760
    %v346 = vsub.f32 %v74, %v345
    %v347 = vand.u32 %v346, 4294901760
    %v348 = vsub.f32 %v346, %v347
    %v349 = vand.u32 %v348, 4294901760
    %350 = vmatprep.subr.mxu0 %v349
    %v351 = vand.u32 %v73, 4294901760
    %v352 = vsub.f32 %v73, %v351
    %v353 = vand.u32 %v352, 4294901760
    %v354 = vsub.f32 %v352, %v353
    %v355 = vand.u32 %v354, 4294901760
    %356 = vmatpush1.xpose.msra.mxu0 %v355
    %v357 = vand.u32 %v76, 4294901760
    %v358 = vsub.f32 %v76, %v357
    %v359 = vand.u32 %v358, 4294901760
    %v360 = vsub.f32 %v358, %v359
    %v361 = vand.u32 %v360, 4294901760
    %362 = vmatprep.subr.mxu0 %v361
    %v363 = vand.u32 %v75, 4294901760
    %v364 = vsub.f32 %v75, %v363
    %v365 = vand.u32 %v364, 4294901760
    %v366 = vsub.f32 %v364, %v365
    %v367 = vand.u32 %v366, 4294901760
    %368 = vmatpush1.xpose.msra.mxu0 %v367
    %v369 = vand.u32 %v78, 4294901760
    %v370 = vsub.f32 %v78, %v369
    %v371 = vand.u32 %v370, 4294901760
    %v372 = vsub.f32 %v370, %v371
    %v373 = vand.u32 %v372, 4294901760
    %374 = vmatprep.subr.mxu0 %v373
    %v375 = vand.u32 %v77, 4294901760
    %v376 = vsub.f32 %v77, %v375
    %v377 = vand.u32 %v376, 4294901760
    %v378 = vsub.f32 %v376, %v377
    %v379 = vand.u32 %v378, 4294901760
    %380 = vmatpush1.xpose.msra.mxu0 %v379
    %v381 = vand.u32 %v80, 4294901760
    %v382 = vsub.f32 %v80, %v381
    %v383 = vand.u32 %v382, 4294901760
    %v384 = vsub.f32 %v382, %v383
    %v385 = vand.u32 %v384, 4294901760
    %386 = vmatprep.subr.mxu0 %v385
    %v387 = vand.u32 %v79, 4294901760
    %v388 = vsub.f32 %v79, %v387
    %v389 = vand.u32 %v388, 4294901760
    %v390 = vsub.f32 %v388, %v389
    %v391 = vand.u32 %v390, 4294901760
    %392 = vmatpush1.xpose.msra.mxu0 %v391
    %393 = vmatprep.subr.mxu0 0.0
    %394 = vmatpush1.xpose.msra.mxu0 0.0
    %395 = vmatprep.subr.mxu0 0.0
    %396 = vmatpush1.xpose.msra.mxu0 0.0
    %397 = vmatprep.subr.mxu0 0.0
    %398 = vmatpush1.xpose.msra.mxu0 0.0
    %399 = vmatprep.subr.mxu0 0.0
    %400 = vmatpush1.xpose.msra.mxu0 0.0
    %401 = vmatprep.subr.mxu0 0.0
    %402 = vmatpush1.xpose.msra.mxu0 0.0
    %403 = vmatprep.subr.mxu0 0.0
    %404 = vmatpush1.xpose.msra.mxu0 0.0
    %405 = vmatprep.subr.mxu0 0.0
    %406 = vmatpush1.xpose.msra.mxu0 0.0
    %407 = vmatprep.subr.mxu0 0.0
    %408 = vmatpush1.xpose.msra.mxu0 0.0
    %409 = vmatprep.subr.mxu0 0.0
    %410 = vmatpush1.xpose.msra.mxu0 0.0
    %411 = vmatprep.subr.mxu0 0.0
    %412 = vmatpush1.xpose.msra.mxu0 0.0
    %413 = vmatprep.subr.mxu0 0.0
    %414 = vmatpush1.xpose.msra.mxu0 0.0
    %415 = vmatprep.subr.mxu0 0.0
    %416 = vmatpush1.xpose.msra.mxu0 0.0
    %417 = vmatprep.subr.mxu0 0.0
    %418 = vmatpush1.xpose.msra.mxu0 0.0
    %419 = vmatprep.subr.mxu0 0.0
    %420 = vmatpush1.xpose.msra.mxu0 0.0
    %421 = vmatprep.subr.mxu0 0.0
    %422 = vmatpush1.xpose.msra.mxu0 0.0
    %423 = vmatprep.subr.mxu0 0.0
    %424 = vmatpush1.xpose.msra.mxu0 0.0
    %v425 = vand.u32 %v48, 4294901760
    %426 = vmatprep.mubr.f32.mxu0 %v425
    %v427 = vand.u32 %v47, 4294901760
    %428 = vmatmul.mubr.f32.gmra.mrb[0].mxu0 %v427
    %v429 = vpop.f32.mrb[0].mxu0
    %v430 = vadd.f32 %v198, %v429
    %v431 = vpop.f32.mrb[0].mxu0
    %432 = vdwg.mxu0
    %v433 = vand.u32 %v50, 4294901760
    %v434 = vsub.f32 %v50, %v433
    %435 = vmatprep.subr.mxu0 %v434
    %v436 = vand.u32 %v49, 4294901760
    %v437 = vsub.f32 %v49, %v436
    %438 = vmatpush1.xpose.msra.mxu0 %v437
    %v439 = vand.u32 %v52, 4294901760
    %v440 = vsub.f32 %v52, %v439
    %441 = vmatprep.subr.mxu0 %v440
    %v442 = vand.u32 %v51, 4294901760
    %v443 = vsub.f32 %v51, %v442
    %444 = vmatpush1.xpose.msra.mxu0 %v443
    %v445 = vand.u32 %v54, 4294901760
    %v446 = vsub.f32 %v54, %v445
    %447 = vmatprep.subr.mxu0 %v446
    %v448 = vand.u32 %v53, 4294901760
    %v449 = vsub.f32 %v53, %v448
    %450 = vmatpush1.xpose.msra.mxu0 %v449
    %v451 = vand.u32 %v56, 4294901760
    %v452 = vsub.f32 %v56, %v451
    %453 = vmatprep.subr.mxu0 %v452
    %v454 = vand.u32 %v55, 4294901760
    %v455 = vsub.f32 %v55, %v454
    %456 = vmatpush1.xpose.msra.mxu0 %v455
    %v457 = vand.u32 %v58, 4294901760
    %v458 = vsub.f32 %v58, %v457
    %459 = vmatprep.subr.mxu0 %v458
    %v460 = vand.u32 %v57, 4294901760
    %v461 = vsub.f32 %v57, %v460
    %462 = vmatpush1.xpose.msra.mxu0 %v461
    %v463 = vand.u32 %v60, 4294901760
    %v464 = vsub.f32 %v60, %v463
    %465 = vmatprep.subr.mxu0 %v464
    %v466 = vand.u32 %v59, 4294901760
    %v467 = vsub.f32 %v59, %v466
    %468 = vmatpush1.xpose.msra.mxu0 %v467
    %v469 = vand.u32 %v62, 4294901760
    %v470 = vsub.f32 %v62, %v469
    %471 = vmatprep.subr.mxu0 %v470
    %v472 = vand.u32 %v61, 4294901760
    %v473 = vsub.f32 %v61, %v472
    %474 = vmatpush1.xpose.msra.mxu0 %v473
    %v475 = vand.u32 %v64, 4294901760
    %v476 = vsub.f32 %v64, %v475
    %477 = vmatprep.subr.mxu0 %v476
    %v478 = vand.u32 %v63, 4294901760
    %v479 = vsub.f32 %v63, %v478
    %480 = vmatpush1.xpose.msra.mxu0 %v479
    %v481 = vand.u32 %v66, 4294901760
    %v482 = vsub.f32 %v66, %v481
    %483 = vmatprep.subr.mxu0 %v482
    %v484 = vand.u32 %v65, 4294901760
    %v485 = vsub.f32 %v65, %v484
    %486 = vmatpush1.xpose.msra.mxu0 %v485
    %v487 = vand.u32 %v68, 4294901760
    %v488 = vsub.f32 %v68, %v487
    %489 = vmatprep.subr.mxu0 %v488
    %v490 = vand.u32 %v67, 4294901760
    %v491 = vsub.f32 %v67, %v490
    %492 = vmatpush1.xpose.msra.mxu0 %v491
    %v493 = vand.u32 %v70, 4294901760
    %v494 = vsub.f32 %v70, %v493
    %495 = vmatprep.subr.mxu0 %v494
    %v496 = vand.u32 %v69, 4294901760
    %v497 = vsub.f32 %v69, %v496
    %498 = vmatpush1.xpose.msra.mxu0 %v497
    %v499 = vand.u32 %v72, 4294901760
    %v500 = vsub.f32 %v72, %v499
    %501 = vmatprep.subr.mxu0 %v500
    %v502 = vand.u32 %v71, 4294901760
    %v503 = vsub.f32 %v71, %v502
    %504 = vmatpush1.xpose.msra.mxu0 %v503
    %v505 = vand.u32 %v74, 4294901760
    %v506 = vsub.f32 %v74, %v505
    %507 = vmatprep.subr.mxu0 %v506
    %v508 = vand.u32 %v73, 4294901760
    %v509 = vsub.f32 %v73, %v508
    %510 = vmatpush1.xpose.msra.mxu0 %v509
    %v511 = vand.u32 %v76, 4294901760
    %v512 = vsub.f32 %v76, %v511
    %513 = vmatprep.subr.mxu0 %v512
    %v514 = vand.u32 %v75, 4294901760
    %v515 = vsub.f32 %v75, %v514
    %516 = vmatpush1.xpose.msra.mxu0 %v515
    %v517 = vand.u32 %v78, 4294901760
    %v518 = vsub.f32 %v78, %v517
    %519 = vmatprep.subr.mxu0 %v518
    %v520 = vand.u32 %v77, 4294901760
    %v521 = vsub.f32 %v77, %v520
    %522 = vmatpush1.xpose.msra.mxu0 %v521
    %v523 = vand.u32 %v80, 4294901760
    %v524 = vsub.f32 %v80, %v523
    %525 = vmatprep.subr.mxu0 %v524
    %v526 = vand.u32 %v79, 4294901760
    %v527 = vsub.f32 %v79, %v526
    %528 = vmatpush1.xpose.msra.mxu0 %v527
    %529 = vmatprep.subr.mxu0 0.0
    %530 = vmatpush1.xpose.msra.mxu0 0.0
    %531 = vmatprep.subr.mxu0 0.0
    %532 = vmatpush1.xpose.msra.mxu0 0.0
    %533 = vmatprep.subr.mxu0 0.0
    %534 = vmatpush1.xpose.msra.mxu0 0.0
    %535 = vmatprep.subr.mxu0 0.0
    %536 = vmatpush1.xpose.msra.mxu0 0.0
    %537 = vmatprep.subr.mxu0 0.0
    %538 = vmatpush1.xpose.msra.mxu0 0.0
    %539 = vmatprep.subr.mxu0 0.0
    %540 = vmatpush1.xpose.msra.mxu0 0.0
    %541 = vmatprep.subr.mxu0 0.0
    %542 = vmatpush1.xpose.msra.mxu0 0.0
    %543 = vmatprep.subr.mxu0 0.0
    %544 = vmatpush1.xpose.msra.mxu0 0.0
    %545 = vmatprep.subr.mxu0 0.0
    %546 = vmatpush1.xpose.msra.mxu0 0.0
    %547 = vmatprep.subr.mxu0 0.0
    %548 = vmatpush1.xpose.msra.mxu0 0.0
    %549 = vmatprep.subr.mxu0 0.0
    %550 = vmatpush1.xpose.msra.mxu0 0.0
    %551 = vmatprep.subr.mxu0 0.0
    %552 = vmatpush1.xpose.msra.mxu0 0.0
    %553 = vmatprep.subr.mxu0 0.0
    %554 = vmatpush1.xpose.msra.mxu0 0.0
    %555 = vmatprep.subr.mxu0 0.0
    %556 = vmatpush1.xpose.msra.mxu0 0.0
    %557 = vmatprep.subr.mxu0 0.0
    %558 = vmatpush1.xpose.msra.mxu0 0.0
    %559 = vmatprep.subr.mxu0 0.0
    %560 = vmatpush1.xpose.msra.mxu0 0.0
    %v561 = vand.u32 %v48, 4294901760
    %v562 = vsub.f32 %v48, %v561
    %563 = vmatprep.mubr.f32.mxu0 %v562
    %v564 = vand.u32 %v47, 4294901760
    %v565 = vsub.f32 %v47, %v564
    %566 = vmatmul.mubr.f32.gmra.mrb[0].mxu0 %v565
    %v567 = vpop.f32.mrb[0].mxu0
    %v568 = vadd.f32 %v430, %v567
    %v569 = vpop.f32.mrb[0].mxu0
    %570 = vdwg.mxu0
    %v571 = vand.u32 %v50, 4294901760
    %572 = vmatprep.subr.mxu0 %v571
    %v573 = vand.u32 %v49, 4294901760
    %574 = vmatpush1.xpose.msra.mxu0 %v573
    %v575 = vand.u32 %v52, 4294901760
    %576 = vmatprep.subr.mxu0 %v575
    %v577 = vand.u32 %v51, 4294901760
    %578 = vmatpush1.xpose.msra.mxu0 %v577
    %v579 = vand.u32 %v54, 4294901760
    %580 = vmatprep.subr.mxu0 %v579
    %v581 = vand.u32 %v53, 4294901760
    %582 = vmatpush1.xpose.msra.mxu0 %v581
    %v583 = vand.u32 %v56, 4294901760
    %584 = vmatprep.subr.mxu0 %v583
    %v585 = vand.u32 %v55, 4294901760
    %586 = vmatpush1.xpose.msra.mxu0 %v585
    %v587 = vand.u32 %v58, 4294901760
    %588 = vmatprep.subr.mxu0 %v587
    %v589 = vand.u32 %v57, 4294901760
    %590 = vmatpush1.xpose.msra.mxu0 %v589
    %v591 = vand.u32 %v60, 4294901760
    %592 = vmatprep.subr.mxu0 %v591
    %v593 = vand.u32 %v59, 4294901760
    %594 = vmatpush1.xpose.msra.mxu0 %v593
    %v595 = vand.u32 %v62, 4294901760
    %596 = vmatprep.subr.mxu0 %v595
    %v597 = vand.u32 %v61, 4294901760
    %598 = vmatpush1.xpose.msra.mxu0 %v597
    %v599 = vand.u32 %v64, 4294901760
    %600 = vmatprep.subr.mxu0 %v599
    %v601 = vand.u32 %v63, 4294901760
    %602 = vmatpush1.xpose.msra.mxu0 %v601
    %v603 = vand.u32 %v66, 4294901760
    %604 = vmatprep.subr.mxu0 %v603
    %v605 = vand.u32 %v65, 4294901760
    %606 = vmatpush1.xpose.msra.mxu0 %v605
    %v607 = vand.u32 %v68, 4294901760
    %608 = vmatprep.subr.mxu0 %v607
    %v609 = vand.u32 %v67, 4294901760
    %610 = vmatpush1.xpose.msra.mxu0 %v609
    %v611 = vand.u32 %v70, 4294901760
    %612 = vmatprep.subr.mxu0 %v611
    %v613 = vand.u32 %v69, 4294901760
    %614 = vmatpush1.xpose.msra.mxu0 %v613
    %v615 = vand.u32 %v72, 4294901760
    %616 = vmatprep.subr.mxu0 %v615
    %v617 = vand.u32 %v71, 4294901760
    %618 = vmatpush1.xpose.msra.mxu0 %v617
    %v619 = vand.u32 %v74, 4294901760
    %620 = vmatprep.subr.mxu0 %v619
    %v621 = vand.u32 %v73, 4294901760
    %622 = vmatpush1.xpose.msra.mxu0 %v621
    %v623 = vand.u32 %v76, 4294901760
    %624 = vmatprep.subr.mxu0 %v623
    %v625 = vand.u32 %v75, 4294901760
    %626 = vmatpush1.xpose.msra.mxu0 %v625
    %v627 = vand.u32 %v78, 4294901760
    %628 = vmatprep.subr.mxu0 %v627
    %v629 = vand.u32 %v77, 4294901760
    %630 = vmatpush1.xpose.msra.mxu0 %v629
    %v631 = vand.u32 %v80, 4294901760
    %632 = vmatprep.subr.mxu0 %v631
    %v633 = vand.u32 %v79, 4294901760
    %634 = vmatpush1.xpose.msra.mxu0 %v633
    %635 = vmatprep.subr.mxu0 0.0
    %636 = vmatpush1.xpose.msra.mxu0 0.0
    %637 = vmatprep.subr.mxu0 0.0
    %638 = vmatpush1.xpose.msra.mxu0 0.0
    %639 = vmatprep.subr.mxu0 0.0
    %640 = vmatpush1.xpose.msra.mxu0 0.0
    %641 = vmatprep.subr.mxu0 0.0
    %642 = vmatpush1.xpose.msra.mxu0 0.0
    %643 = vmatprep.subr.mxu0 0.0
    %644 = vmatpush1.xpose.msra.mxu0 0.0
    %645 = vmatprep.subr.mxu0 0.0
    %646 = vmatpush1.xpose.msra.mxu0 0.0
    %647 = vmatprep.subr.mxu0 0.0
    %648 = vmatpush1.xpose.msra.mxu0 0.0
    %649 = vmatprep.subr.mxu0 0.0
    %650 = vmatpush1.xpose.msra.mxu0 0.0
    %651 = vmatprep.subr.mxu0 0.0
    %652 = vmatpush1.xpose.msra.mxu0 0.0
    %653 = vmatprep.subr.mxu0 0.0
    %654 = vmatpush1.xpose.msra.mxu0 0.0
    %655 = vmatprep.subr.mxu0 0.0
    %656 = vmatpush1.xpose.msra.mxu0 0.0
    %657 = vmatprep.subr.mxu0 0.0
    %658 = vmatpush1.xpose.msra.mxu0 0.0
    %659 = vmatprep.subr.mxu0 0.0
    %660 = vmatpush1.xpose.msra.mxu0 0.0
    %661 = vmatprep.subr.mxu0 0.0
    %662 = vmatpush1.xpose.msra.mxu0 0.0
    %663 = vmatprep.subr.mxu0 0.0
    %664 = vmatpush1.xpose.msra.mxu0 0.0
    %665 = vmatprep.subr.mxu0 0.0
    %666 = vmatpush1.xpose.msra.mxu0 0.0
    %v667 = vand.u32 %v48, 4294901760
    %v668 = vsub.f32 %v48, %v667
    %v669 = vand.u32 %v668, 4294901760
    %670 = vmatprep.mubr.f32.mxu0 %v669
    %v671 = vand.u32 %v47, 4294901760
    %v672 = vsub.f32 %v47, %v671
    %v673 = vand.u32 %v672, 4294901760
    %674 = vmatmul.mubr.f32.gmra.mrb[0].mxu0 %v673
    %v675 = vpop.f32.mrb[0].mxu0
    %v676 = vadd.f32 %v568, %v675
    %v677 = vpop.f32.mrb[0].mxu0
    %678 = vdwg.mxu0
    %v679 = vand.u32 %v50, 4294901760
    %v680 = vsub.f32 %v50, %v679
    %v681 = vand.u32 %v680, 4294901760
    %682 = vmatprep.subr.mxu0 %v681
    %v683 = vand.u32 %v49, 4294901760
    %v684 = vsub.f32 %v49, %v683
    %v685 = vand.u32 %v684, 4294901760
    %686 = vmatpush1.xpose.msra.mxu0 %v685
    %v687 = vand.u32 %v52, 4294901760
    %v688 = vsub.f32 %v52, %v687
    %v689 = vand.u32 %v688, 4294901760
    %690 = vmatprep.subr.mxu0 %v689
    %v691 = vand.u32 %v51, 4294901760
    %v692 = vsub.f32 %v51, %v691
    %v693 = vand.u32 %v692, 4294901760
    %694 = vmatpush1.xpose.msra.mxu0 %v693
    %v695 = vand.u32 %v54, 4294901760
    %v696 = vsub.f32 %v54, %v695
    %v697 = vand.u32 %v696, 4294901760
    %698 = vmatprep.subr.mxu0 %v697
    %v699 = vand.u32 %v53, 4294901760
    %v700 = vsub.f32 %v53, %v699
    %v701 = vand.u32 %v700, 4294901760
    %702 = vmatpush1.xpose.msra.mxu0 %v701
    %v703 = vand.u32 %v56, 4294901760
    %v704 = vsub.f32 %v56, %v703
    %v705 = vand.u32 %v704, 4294901760
    %706 = vmatprep.subr.mxu0 %v705
    %v707 = vand.u32 %v55, 4294901760
    %v708 = vsub.f32 %v55, %v707
    %v709 = vand.u32 %v708, 4294901760
    %710 = vmatpush1.xpose.msra.mxu0 %v709
    %v711 = vand.u32 %v58, 4294901760
    %v712 = vsub.f32 %v58, %v711
    %v713 = vand.u32 %v712, 4294901760
    %714 = vmatprep.subr.mxu0 %v713
    %v715 = vand.u32 %v57, 4294901760
    %v716 = vsub.f32 %v57, %v715
    %v717 = vand.u32 %v716, 4294901760
    %718 = vmatpush1.xpose.msra.mxu0 %v717
    %v719 = vand.u32 %v60, 4294901760
    %v720 = vsub.f32 %v60, %v719
    %v721 = vand.u32 %v720, 4294901760
    %722 = vmatprep.subr.mxu0 %v721
    %v723 = vand.u32 %v59, 4294901760
    %v724 = vsub.f32 %v59, %v723
    %v725 = vand.u32 %v724, 4294901760
    %726 = vmatpush1.xpose.msra.mxu0 %v725
    %v727 = vand.u32 %v62, 4294901760
    %v728 = vsub.f32 %v62, %v727
    %v729 = vand.u32 %v728, 4294901760
    %730 = vmatprep.subr.mxu0 %v729
    %v731 = vand.u32 %v61, 4294901760
    %v732 = vsub.f32 %v61, %v731
    %v733 = vand.u32 %v732, 4294901760
    %734 = vmatpush1.xpose.msra.mxu0 %v733
    %v735 = vand.u32 %v64, 4294901760
    %v736 = vsub.f32 %v64, %v735
    %v737 = vand.u32 %v736, 4294901760
    %738 = vmatprep.subr.mxu0 %v737
    %v739 = vand.u32 %v63, 4294901760
    %v740 = vsub.f32 %v63, %v739
    %v741 = vand.u32 %v740, 4294901760
    %742 = vmatpush1.xpose.msra.mxu0 %v741
    %v743 = vand.u32 %v66, 4294901760
    %v744 = vsub.f32 %v66, %v743
    %v745 = vand.u32 %v744, 4294901760
    %746 = vmatprep.subr.mxu0 %v745
    %v747 = vand.u32 %v65, 4294901760
    %v748 = vsub.f32 %v65, %v747
    %v749 = vand.u32 %v748, 4294901760
    %750 = vmatpush1.xpose.msra.mxu0 %v749
    %v751 = vand.u32 %v68, 4294901760
    %v752 = vsub.f32 %v68, %v751
    %v753 = vand.u32 %v752, 4294901760
    %754 = vmatprep.subr.mxu0 %v753
    %v755 = vand.u32 %v67, 4294901760
    %v756 = vsub.f32 %v67, %v755
    %v757 = vand.u32 %v756, 4294901760
    %758 = vmatpush1.xpose.msra.mxu0 %v757
    %v759 = vand.u32 %v70, 4294901760
    %v760 = vsub.f32 %v70, %v759
    %v761 = vand.u32 %v760, 4294901760
    %762 = vmatprep.subr.mxu0 %v761
    %v763 = vand.u32 %v69, 4294901760
    %v764 = vsub.f32 %v69, %v763
    %v765 = vand.u32 %v764, 4294901760
    %766 = vmatpush1.xpose.msra.mxu0 %v765
    %v767 = vand.u32 %v72, 4294901760
    %v768 = vsub.f32 %v72, %v767
    %v769 = vand.u32 %v768, 4294901760
    %770 = vmatprep.subr.mxu0 %v769
    %v771 = vand.u32 %v71, 4294901760
    %v772 = vsub.f32 %v71, %v771
    %v773 = vand.u32 %v772, 4294901760
    %774 = vmatpush1.xpose.msra.mxu0 %v773
    %v775 = vand.u32 %v74, 4294901760
    %v776 = vsub.f32 %v74, %v775
    %v777 = vand.u32 %v776, 4294901760
    %778 = vmatprep.subr.mxu0 %v777
    %v779 = vand.u32 %v73, 4294901760
    %v780 = vsub.f32 %v73, %v779
    %v781 = vand.u32 %v780, 4294901760
    %782 = vmatpush1.xpose.msra.mxu0 %v781
    %v783 = vand.u32 %v76, 4294901760
    %v784 = vsub.f32 %v76, %v783
    %v785 = vand.u32 %v784, 4294901760
    %786 = vmatprep.subr.mxu0 %v785
    %v787 = vand.u32 %v75, 4294901760
    %v788 = vsub.f32 %v75, %v787
    %v789 = vand.u32 %v788, 4294901760
    %790 = vmatpush1.xpose.msra.mxu0 %v789
    %v791 = vand.u32 %v78, 4294901760
    %v792 = vsub.f32 %v78, %v791
    %v793 = vand.u32 %v792, 4294901760
    %794 = vmatprep.subr.mxu0 %v793
    %v795 = vand.u32 %v77, 4294901760
    %v796 = vsub.f32 %v77, %v795
    %v797 = vand.u32 %v796, 4294901760
    %798 = vmatpush1.xpose.msra.mxu0 %v797
    %v799 = vand.u32 %v80, 4294901760
    %v800 = vsub.f32 %v80, %v799
    %v801 = vand.u32 %v800, 4294901760
    %802 = vmatprep.subr.mxu0 %v801
    %v803 = vand.u32 %v79, 4294901760
    %v804 = vsub.f32 %v79, %v803
    %v805 = vand.u32 %v804, 4294901760
    %806 = vmatpush1.xpose.msra.mxu0 %v805
    %807 = vmatprep.subr.mxu0 0.0
    %808 = vmatpush1.xpose.msra.mxu0 0.0
    %809 = vmatprep.subr.mxu0 0.0
    %810 = vmatpush1.xpose.msra.mxu0 0.0
    %811 = vmatprep.subr.mxu0 0.0
    %812 = vmatpush1.xpose.msra.mxu0 0.0
    %813 = vmatprep.subr.mxu0 0.0
    %814 = vmatpush1.xpose.msra.mxu0 0.0
    %815 = vmatprep.subr.mxu0 0.0
    %816 = vmatpush1.xpose.msra.mxu0 0.0
    %817 = vmatprep.subr.mxu0 0.0
    %818 = vmatpush1.xpose.msra.mxu0 0.0
    %819 = vmatprep.subr.mxu0 0.0
    %820 = vmatpush1.xpose.msra.mxu0 0.0
    %821 = vmatprep.subr.mxu0 0.0
    %822 = vmatpush1.xpose.msra.mxu0 0.0
    %823 = vmatprep.subr.mxu0 0.0
    %824 = vmatpush1.xpose.msra.mxu0 0.0
    %825 = vmatprep.subr.mxu0 0.0
    %826 = vmatpush1.xpose.msra.mxu0 0.0
    %827 = vmatprep.subr.mxu0 0.0
    %828 = vmatpush1.xpose.msra.mxu0 0.0
    %829 = vmatprep.subr.mxu0 0.0
    %830 = vmatpush1.xpose.msra.mxu0 0.0
    %831 = vmatprep.subr.mxu0 0.0
    %832 = vmatpush1.xpose.msra.mxu0 0.0
    %833 = vmatprep.subr.mxu0 0.0
    %834 = vmatpush1.xpose.msra.mxu0 0.0
    %835 = vmatprep.subr.mxu0 0.0
    %836 = vmatpush1.xpose.msra.mxu0 0.0
    %837 = vmatprep.subr.mxu0 0.0
    %838 = vmatpush1.xpose.msra.mxu0 0.0
    %v839 = vand.u32 %v48, 4294901760
    %840 = vmatprep.mubr.f32.mxu0 %v839
    %v841 = vand.u32 %v47, 4294901760
    %842 = vmatmul.mubr.f32.gmra.mrb[0].mxu0 %v841
    %v843 = vpop.f32.mrb[0].mxu0
    %v844 = vadd.f32 %v676, %v843
    %v845 = vpop.f32.mrb[0].mxu0
    %846 = vdwg.mxu0
    %v847 = vand.u32 %v50, 4294901760
    %848 = vmatprep.subr.mxu0 %v847
    %v849 = vand.u32 %v49, 4294901760
    %850 = vmatpush1.xpose.msra.mxu0 %v849
    %v851 = vand.u32 %v52, 4294901760
    %852 = vmatprep.subr.mxu0 %v851
    %v853 = vand.u32 %v51, 4294901760
    %854 = vmatpush1.xpose.msra.mxu0 %v853
    %v855 = vand.u32 %v54, 4294901760
    %856 = vmatprep.subr.mxu0 %v855
    %v857 = vand.u32 %v53, 4294901760
    %858 = vmatpush1.xpose.msra.mxu0 %v857
    %v859 = vand.u32 %v56, 4294901760
    %860 = vmatprep.subr.mxu0 %v859
    %v861 = vand.u32 %v55, 4294901760
    %862 = vmatpush1.xpose.msra.mxu0 %v861
    %v863 = vand.u32 %v58, 4294901760
    %864 = vmatprep.subr.mxu0 %v863
    %v865 = vand.u32 %v57, 4294901760
    %866 = vmatpush1.xpose.msra.mxu0 %v865
    %v867 = vand.u32 %v60, 4294901760
    %868 = vmatprep.subr.mxu0 %v867
    %v869 = vand.u32 %v59, 4294901760
    %870 = vmatpush1.xpose.msra.mxu0 %v869
    %v871 = vand.u32 %v62, 4294901760
    %872 = vmatprep.subr.mxu0 %v871
    %v873 = vand.u32 %v61, 4294901760
    %874 = vmatpush1.xpose.msra.mxu0 %v873
    %v875 = vand.u32 %v64, 4294901760
    %876 = vmatprep.subr.mxu0 %v875
    %v877 = vand.u32 %v63, 4294901760
    %878 = vmatpush1.xpose.msra.mxu0 %v877
    %v879 = vand.u32 %v66, 4294901760
    %880 = vmatprep.subr.mxu0 %v879
    %v881 = vand.u32 %v65, 4294901760
    %882 = vmatpush1.xpose.msra.mxu0 %v881
    %v883 = vand.u32 %v68, 4294901760
    %884 = vmatprep.subr.mxu0 %v883
    %v885 = vand.u32 %v67, 4294901760
    %886 = vmatpush1.xpose.msra.mxu0 %v885
    %v887 = vand.u32 %v70, 4294901760
    %888 = vmatprep.subr.mxu0 %v887
    %v889 = vand.u32 %v69, 4294901760
    %890 = vmatpush1.xpose.msra.mxu0 %v889
    %v891 = vand.u32 %v72, 4294901760
    %892 = vmatprep.subr.mxu0 %v891
    %v893 = vand.u32 %v71, 4294901760
    %894 = vmatpush1.xpose.msra.mxu0 %v893
    %v895 = vand.u32 %v74, 4294901760
    %896 = vmatprep.subr.mxu0 %v895
    %v897 = vand.u32 %v73, 4294901760
    %898 = vmatpush1.xpose.msra.mxu0 %v897
    %v899 = vand.u32 %v76, 4294901760
    %900 = vmatprep.subr.mxu0 %v899
    %v901 = vand.u32 %v75, 4294901760
    %902 = vmatpush1.xpose.msra.mxu0 %v901
    %v903 = vand.u32 %v78, 4294901760
    %904 = vmatprep.subr.mxu0 %v903
    %v905 = vand.u32 %v77, 4294901760
    %906 = vmatpush1.xpose.msra.mxu0 %v905
    %v907 = vand.u32 %v80, 4294901760
    %908 = vmatprep.subr.mxu0 %v907
    %v909 = vand.u32 %v79, 4294901760
    %910 = vmatpush1.xpose.msra.mxu0 %v909
    %911 = vmatprep.subr.mxu0 0.0
    %912 = vmatpush1.xpose.msra.mxu0 0.0
    %913 = vmatprep.subr.mxu0 0.0
    %914 = vmatpush1.xpose.msra.mxu0 0.0
    %915 = vmatprep.subr.mxu0 0.0
    %916 = vmatpush1.xpose.msra.mxu0 0.0
    %917 = vmatprep.subr.mxu0 0.0
    %918 = vmatpush1.xpose.msra.mxu0 0.0
    %919 = vmatprep.subr.mxu0 0.0
    %920 = vmatpush1.xpose.msra.mxu0 0.0
    %921 = vmatprep.subr.mxu0 0.0
    %922 = vmatpush1.xpose.msra.mxu0 0.0
    %923 = vmatprep.subr.mxu0 0.0
    %924 = vmatpush1.xpose.msra.mxu0 0.0
    %925 = vmatprep.subr.mxu0 0.0
    %926 = vmatpush1.xpose.msra.mxu0 0.0
    %927 = vmatprep.subr.mxu0 0.0
    %928 = vmatpush1.xpose.msra.mxu0 0.0
    %929 = vmatprep.subr.mxu0 0.0
    %930 = vmatpush1.xpose.msra.mxu0 0.0
    %931 = vmatprep.subr.mxu0 0.0
    %932 = vmatpush1.xpose.msra.mxu0 0.0
    %933 = vmatprep.subr.mxu0 0.0
    %934 = vmatpush1.xpose.msra.mxu0 0.0
    %935 = vmatprep.subr.mxu0 0.0
    %936 = vmatpush1.xpose.msra.mxu0 0.0
    %937 = vmatprep.subr.mxu0 0.0
    %938 = vmatpush1.xpose.msra.mxu0 0.0
    %939 = vmatprep.subr.mxu0 0.0
    %940 = vmatpush1.xpose.msra.mxu0 0.0
    %941 = vmatprep.subr.mxu0 0.0
    %942 = vmatpush1.xpose.msra.mxu0 0.0
    %v943 = vand.u32 %v48, 4294901760
    %944 = vmatprep.mubr.f32.mxu0 %v943
    %v945 = vand.u32 %v47, 4294901760
    %946 = vmatmul.mubr.f32.gmra.mrb[0].mxu0 %v945
    %v947 = vpop.f32.mrb[0].mxu0
    %v948 = vadd.f32 %v844, %v947
    %v949 = vpop.f32.mrb[0].mxu0
    %950 = vdwg.mxu0
    %v951 = vsub.f32 0.0, %v948
    %v952 = vmul.f32 %v951, 1.442695
    %v953 = vpow.pop %v952
    %v954 = vadd.f32 %v953, 1.0
    %v955 = vrcp.pop %v954
    %v957 = vlaneseq
    %v958 = vshrl.u32 %v957, 7
    %v959 = vsub.s32 0, %v958
    %v960 = vrot.slane %v82, %v959
    %v961 = vlaneseq
    %v962 = vshrl.u32 %v961, 7
    %v963 = vsub.s32 1, %v962
    %v964 = vrot.slane %v82, %v963
    %v967 = vand.u32 %v50, 4294901760
    %968 = vmatprep.subr.mxu0 %v967
    %v969 = vand.u32 %v49, 4294901760
    %970 = vmatpush1.msra.mxu0 %v969
    %v971 = vand.u32 %v52, 4294901760
    %972 = vmatprep.subr.mxu0 %v971
    %v973 = vand.u32 %v51, 4294901760
    %974 = vmatpush1.msra.mxu0 %v973
    %v975 = vand.u32 %v54, 4294901760
    %976 = vmatprep.subr.mxu0 %v975
    %v977 = vand.u32 %v53, 4294901760
    %978 = vmatpush1.msra.mxu0 %v977
    %v979 = vand.u32 %v56, 4294901760
    %980 = vmatprep.subr.mxu0 %v979
    %v981 = vand.u32 %v55, 4294901760
    %982 = vmatpush1.msra.mxu0 %v981
    %v983 = vand.u32 %v58, 4294901760
    %984 = vmatprep.subr.mxu0 %v983
    %v985 = vand.u32 %v57, 4294901760
    %986 = vmatpush1.msra.mxu0 %v985
    %v987 = vand.u32 %v60, 4294901760
    %988 = vmatprep.subr.mxu0 %v987
    %v989 = vand.u32 %v59, 4294901760
    %990 = vmatpush1.msra.mxu0 %v989
    %v991 = vand.u32 %v62, 4294901760
    %992 = vmatprep.subr.mxu0 %v991
    %v993 = vand.u32 %v61, 4294901760
    %994 = vmatpush1.msra.mxu0 %v993
    %v995 = vand.u32 %v64, 4294901760
    %996 = vmatprep.subr.mxu0 %v995
    %v997 = vand.u32 %v63, 4294901760
    %998 = vmatpush1.msra.mxu0 %v997
    %v999 = vand.u32 %v66, 4294901760
    %1000 = vmatprep.subr.mxu0 %v999
    %v1001 = vand.u32 %v65, 4294901760
    %1002 = vmatpush1.msra.mxu0 %v1001
    %v1003 = vand.u32 %v68, 4294901760
    %1004 = vmatprep.subr.mxu0 %v1003
    %v1005 = vand.u32 %v67, 4294901760
    %1006 = vmatpush1.msra.mxu0 %v1005
    %v1007 = vand.u32 %v70, 4294901760
    %1008 = vmatprep.subr.mxu0 %v1007
    %v1009 = vand.u32 %v69, 4294901760
    %1010 = vmatpush1.msra.mxu0 %v1009
    %v1011 = vand.u32 %v72, 4294901760
    %1012 = vmatprep.subr.mxu0 %v1011
    %v1013 = vand.u32 %v71, 4294901760
    %1014 = vmatpush1.msra.mxu0 %v1013
    %v1015 = vand.u32 %v74, 4294901760
    %1016 = vmatprep.subr.mxu0 %v1015
    %v1017 = vand.u32 %v73, 4294901760
    %1018 = vmatpush1.msra.mxu0 %v1017
    %v1019 = vand.u32 %v76, 4294901760
    %1020 = vmatprep.subr.mxu0 %v1019
    %v1021 = vand.u32 %v75, 4294901760
    %1022 = vmatpush1.msra.mxu0 %v1021
    %v1023 = vand.u32 %v78, 4294901760
    %1024 = vmatprep.subr.mxu0 %v1023
    %v1025 = vand.u32 %v77, 4294901760
    %1026 = vmatpush1.msra.mxu0 %v1025
    %v1027 = vand.u32 %v80, 4294901760
    %1028 = vmatprep.subr.mxu0 %v1027
    %v1029 = vand.u32 %v79, 4294901760
    %1030 = vmatpush1.msra.mxu0 %v1029
    %1031 = vmatprep.subr.mxu0 0.0
    %1032 = vmatpush1.msra.mxu0 0.0
    %1033 = vmatprep.subr.mxu0 0.0
    %1034 = vmatpush1.msra.mxu0 0.0
    %1035 = vmatprep.subr.mxu0 0.0
    %1036 = vmatpush1.msra.mxu0 0.0
    %1037 = vmatprep.subr.mxu0 0.0
    %1038 = vmatpush1.msra.mxu0 0.0
    %1039 = vmatprep.subr.mxu0 0.0
    %1040 = vmatpush1.msra.mxu0 0.0
    %1041 = vmatprep.subr.mxu0 0.0
    %1042 = vmatpush1.msra.mxu0 0.0
    %1043 = vmatprep.subr.mxu0 0.0
    %1044 = vmatpush1.msra.mxu0 0.0
    %1045 = vmatprep.subr.mxu0 0.0
    %1046 = vmatpush1.msra.mxu0 0.0
    %1047 = vmatprep.subr.mxu0 0.0
    %1048 = vmatpush1.msra.mxu0 0.0
    %1049 = vmatprep.subr.mxu0 0.0
    %1050 = vmatpush1.msra.mxu0 0.0
    %1051 = vmatprep.subr.mxu0 0.0
    %1052 = vmatpush1.msra.mxu0 0.0
    %1053 = vmatprep.subr.mxu0 0.0
    %1054 = vmatpush1.msra.mxu0 0.0
    %1055 = vmatprep.subr.mxu0 0.0
    %1056 = vmatpush1.msra.mxu0 0.0
    %1057 = vmatprep.subr.mxu0 0.0
    %1058 = vmatpush1.msra.mxu0 0.0
    %1059 = vmatprep.subr.mxu0 0.0
    %1060 = vmatpush1.msra.mxu0 0.0
    %1061 = vmatprep.subr.mxu0 0.0
    %1062 = vmatpush1.msra.mxu0 0.0
    %1063 = vmatprep.mubr.f32.mxu0 0.0
    %v1064 = vand.u32 %v955, 4294901760
    %v1065 = vsub.f32 %v955, %v1064
    %v1066 = vand.u32 %v1065, 4294901760
    %v1067 = vsub.f32 %v1065, %v1066
    %v1068 = vand.u32 %v1067, 4294901760
    %1069 = vmatmul.mubr.f32.gmra.mrb[0].mxu0 %v1068
    %v1070 = vpop.f32.mrb[0].mxu0
    %v1071 = vadd.f32 %v960, %v1070
    %v1072 = vpop.f32.mrb[0].mxu0
    %v1073 = vadd.f32 %v964, %v1072
    %1074 = vdwg.mxu0
    %v1075 = vand.u32 %v50, 4294901760
    %v1076 = vsub.f32 %v50, %v1075
    %v1077 = vand.u32 %v1076, 4294901760
    %v1078 = vsub.f32 %v1076, %v1077
    %v1079 = vand.u32 %v1078, 4294901760
    %1080 = vmatprep.subr.mxu0 %v1079
    %v1081 = vand.u32 %v49, 4294901760
    %v1082 = vsub.f32 %v49, %v1081
    %v1083 = vand.u32 %v1082, 4294901760
    %v1084 = vsub.f32 %v1082, %v1083
    %v1085 = vand.u32 %v1084, 4294901760
    %1086 = vmatpush1.msra.mxu0 %v1085
    %v1087 = vand.u32 %v52, 4294901760
    %v1088 = vsub.f32 %v52, %v1087
    %v1089 = vand.u32 %v1088, 4294901760
    %v1090 = vsub.f32 %v1088, %v1089
    %v1091 = vand.u32 %v1090, 4294901760
    %1092 = vmatprep.subr.mxu0 %v1091
    %v1093 = vand.u32 %v51, 4294901760
    %v1094 = vsub.f32 %v51, %v1093
    %v1095 = vand.u32 %v1094, 4294901760
    %v1096 = vsub.f32 %v1094, %v1095
    %v1097 = vand.u32 %v1096, 4294901760
    %1098 = vmatpush1.msra.mxu0 %v1097
    %v1099 = vand.u32 %v54, 4294901760
    %v1100 = vsub.f32 %v54, %v1099
    %v1101 = vand.u32 %v1100, 4294901760
    %v1102 = vsub.f32 %v1100, %v1101
    %v1103 = vand.u32 %v1102, 4294901760
    %1104 = vmatprep.subr.mxu0 %v1103
    %v1105 = vand.u32 %v53, 4294901760
    %v1106 = vsub.f32 %v53, %v1105
    %v1107 = vand.u32 %v1106, 4294901760
    %v1108 = vsub.f32 %v1106, %v1107
    %v1109 = vand.u32 %v1108, 4294901760
    %1110 = vmatpush1.msra.mxu0 %v1109
    %v1111 = vand.u32 %v56, 4294901760
    %v1112 = vsub.f32 %v56, %v1111
    %v1113 = vand.u32 %v1112, 4294901760
    %v1114 = vsub.f32 %v1112, %v1113
    %v1115 = vand.u32 %v1114, 4294901760
    %1116 = vmatprep.subr.mxu0 %v1115
    %v1117 = vand.u32 %v55, 4294901760
    %v1118 = vsub.f32 %v55, %v1117
    %v1119 = vand.u32 %v1118, 4294901760
    %v1120 = vsub.f32 %v1118, %v1119
    %v1121 = vand.u32 %v1120, 4294901760
    %1122 = vmatpush1.msra.mxu0 %v1121
    %v1123 = vand.u32 %v58, 4294901760
    %v1124 = vsub.f32 %v58, %v1123
    %v1125 = vand.u32 %v1124, 4294901760
    %v1126 = vsub.f32 %v1124, %v1125
    %v1127 = vand.u32 %v1126, 4294901760
    %1128 = vmatprep.subr.mxu0 %v1127
    %v1129 = vand.u32 %v57, 4294901760
    %v1130 = vsub.f32 %v57, %v1129
    %v1131 = vand.u32 %v1130, 4294901760
    %v1132 = vsub.f32 %v1130, %v1131
    %v1133 = vand.u32 %v1132, 4294901760
    %1134 = vmatpush1.msra.mxu0 %v1133
    %v1135 = vand.u32 %v60, 4294901760
    %v1136 = vsub.f32 %v60, %v1135
    %v1137 = vand.u32 %v1136, 4294901760
    %v1138 = vsub.f32 %v1136, %v1137
    %v1139 = vand.u32 %v1138, 4294901760
    %1140 = vmatprep.subr.mxu0 %v1139
    %v1141 = vand.u32 %v59, 4294901760
    %v1142 = vsub.f32 %v59, %v1141
    %v1143 = vand.u32 %v1142, 4294901760
    %v1144 = vsub.f32 %v1142, %v1143
    %v1145 = vand.u32 %v1144, 4294901760
    %1146 = vmatpush1.msra.mxu0 %v1145
    %v1147 = vand.u32 %v62, 4294901760
    %v1148 = vsub.f32 %v62, %v1147
    %v1149 = vand.u32 %v1148, 4294901760
    %v1150 = vsub.f32 %v1148, %v1149
    %v1151 = vand.u32 %v1150, 4294901760
    %1152 = vmatprep.subr.mxu0 %v1151
    %v1153 = vand.u32 %v61, 4294901760
    %v1154 = vsub.f32 %v61, %v1153
    %v1155 = vand.u32 %v1154, 4294901760
    %v1156 = vsub.f32 %v1154, %v1155
    %v1157 = vand.u32 %v1156, 4294901760
    %1158 = vmatpush1.msra.mxu0 %v1157
    %v1159 = vand.u32 %v64, 4294901760
    %v1160 = vsub.f32 %v64, %v1159
    %v1161 = vand.u32 %v1160, 4294901760
    %v1162 = vsub.f32 %v1160, %v1161
    %v1163 = vand.u32 %v1162, 4294901760
    %1164 = vmatprep.subr.mxu0 %v1163
    %v1165 = vand.u32 %v63, 4294901760
    %v1166 = vsub.f32 %v63, %v1165
    %v1167 = vand.u32 %v1166, 4294901760
    %v1168 = vsub.f32 %v1166, %v1167
    %v1169 = vand.u32 %v1168, 4294901760
    %1170 = vmatpush1.msra.mxu0 %v1169
    %v1171 = vand.u32 %v66, 4294901760
    %v1172 = vsub.f32 %v66, %v1171
    %v1173 = vand.u32 %v1172, 4294901760
    %v1174 = vsub.f32 %v1172, %v1173
    %v1175 = vand.u32 %v1174, 4294901760
    %1176 = vmatprep.subr.mxu0 %v1175
    %v1177 = vand.u32 %v65, 4294901760
    %v1178 = vsub.f32 %v65, %v1177
    %v1179 = vand.u32 %v1178, 4294901760
    %v1180 = vsub.f32 %v1178, %v1179
    %v1181 = vand.u32 %v1180, 4294901760
    %1182 = vmatpush1.msra.mxu0 %v1181
    %v1183 = vand.u32 %v68, 4294901760
    %v1184 = vsub.f32 %v68, %v1183
    %v1185 = vand.u32 %v1184, 4294901760
    %v1186 = vsub.f32 %v1184, %v1185
    %v1187 = vand.u32 %v1186, 4294901760
    %1188 = vmatprep.subr.mxu0 %v1187
    %v1189 = vand.u32 %v67, 4294901760
    %v1190 = vsub.f32 %v67, %v1189
    %v1191 = vand.u32 %v1190, 4294901760
    %v1192 = vsub.f32 %v1190, %v1191
    %v1193 = vand.u32 %v1192, 4294901760
    %1194 = vmatpush1.msra.mxu0 %v1193
    %v1195 = vand.u32 %v70, 4294901760
    %v1196 = vsub.f32 %v70, %v1195
    %v1197 = vand.u32 %v1196, 4294901760
    %v1198 = vsub.f32 %v1196, %v1197
    %v1199 = vand.u32 %v1198, 4294901760
    %1200 = vmatprep.subr.mxu0 %v1199
    %v1201 = vand.u32 %v69, 4294901760
    %v1202 = vsub.f32 %v69, %v1201
    %v1203 = vand.u32 %v1202, 4294901760
    %v1204 = vsub.f32 %v1202, %v1203
    %v1205 = vand.u32 %v1204, 4294901760
    %1206 = vmatpush1.msra.mxu0 %v1205
    %v1207 = vand.u32 %v72, 4294901760
    %v1208 = vsub.f32 %v72, %v1207
    %v1209 = vand.u32 %v1208, 4294901760
    %v1210 = vsub.f32 %v1208, %v1209
    %v1211 = vand.u32 %v1210, 4294901760
    %1212 = vmatprep.subr.mxu0 %v1211
    %v1213 = vand.u32 %v71, 4294901760
    %v1214 = vsub.f32 %v71, %v1213
    %v1215 = vand.u32 %v1214, 4294901760
    %v1216 = vsub.f32 %v1214, %v1215
    %v1217 = vand.u32 %v1216, 4294901760
    %1218 = vmatpush1.msra.mxu0 %v1217
    %v1219 = vand.u32 %v74, 4294901760
    %v1220 = vsub.f32 %v74, %v1219
    %v1221 = vand.u32 %v1220, 4294901760
    %v1222 = vsub.f32 %v1220, %v1221
    %v1223 = vand.u32 %v1222, 4294901760
    %1224 = vmatprep.subr.mxu0 %v1223
    %v1225 = vand.u32 %v73, 4294901760
    %v1226 = vsub.f32 %v73, %v1225
    %v1227 = vand.u32 %v1226, 4294901760
    %v1228 = vsub.f32 %v1226, %v1227
    %v1229 = vand.u32 %v1228, 4294901760
    %1230 = vmatpush1.msra.mxu0 %v1229
    %v1231 = vand.u32 %v76, 4294901760
    %v1232 = vsub.f32 %v76, %v1231
    %v1233 = vand.u32 %v1232, 4294901760
    %v1234 = vsub.f32 %v1232, %v1233
    %v1235 = vand.u32 %v1234, 4294901760
    %1236 = vmatprep.subr.mxu0 %v1235
    %v1237 = vand.u32 %v75, 4294901760
    %v1238 = vsub.f32 %v75, %v1237
    %v1239 = vand.u32 %v1238, 4294901760
    %v1240 = vsub.f32 %v1238, %v1239
    %v1241 = vand.u32 %v1240, 4294901760
    %1242 = vmatpush1.msra.mxu0 %v1241
    %v1243 = vand.u32 %v78, 4294901760
    %v1244 = vsub.f32 %v78, %v1243
    %v1245 = vand.u32 %v1244, 4294901760
    %v1246 = vsub.f32 %v1244, %v1245
    %v1247 = vand.u32 %v1246, 4294901760
    %1248 = vmatprep.subr.mxu0 %v1247
    %v1249 = vand.u32 %v77, 4294901760
    %v1250 = vsub.f32 %v77, %v1249
    %v1251 = vand.u32 %v1250, 4294901760
    %v1252 = vsub.f32 %v1250, %v1251
    %v1253 = vand.u32 %v1252, 4294901760
    %1254 = vmatpush1.msra.mxu0 %v1253
    %v1255 = vand.u32 %v80, 4294901760
    %v1256 = vsub.f32 %v80, %v1255
    %v1257 = vand.u32 %v1256, 4294901760
    %v1258 = vsub.f32 %v1256, %v1257
    %v1259 = vand.u32 %v1258, 4294901760
    %1260 = vmatprep.subr.mxu0 %v1259
    %v1261 = vand.u32 %v79, 4294901760
    %v1262 = vsub.f32 %v79, %v1261
    %v1263 = vand.u32 %v1262, 4294901760
    %v1264 = vsub.f32 %v1262, %v1263
    %v1265 = vand.u32 %v1264, 4294901760
    %1266 = vmatpush1.msra.mxu0 %v1265
    %1267 = vmatprep.subr.mxu0 0.0
    %1268 = vmatpush1.msra.mxu0 0.0
    %1269 = vmatprep.subr.mxu0 0.0
    %1270 = vmatpush1.msra.mxu0 0.0
    %1271 = vmatprep.subr.mxu0 0.0
    %1272 = vmatpush1.msra.mxu0 0.0
    %1273 = vmatprep.subr.mxu0 0.0
    %1274 = vmatpush1.msra.mxu0 0.0
    %1275 = vmatprep.subr.mxu0 0.0
    %1276 = vmatpush1.msra.mxu0 0.0
    %1277 = vmatprep.subr.mxu0 0.0
    %1278 = vmatpush1.msra.mxu0 0.0
    %1279 = vmatprep.subr.mxu0 0.0
    %1280 = vmatpush1.msra.mxu0 0.0
    %1281 = vmatprep.subr.mxu0 0.0
    %1282 = vmatpush1.msra.mxu0 0.0
    %1283 = vmatprep.subr.mxu0 0.0
    %1284 = vmatpush1.msra.mxu0 0.0
    %1285 = vmatprep.subr.mxu0 0.0
    %1286 = vmatpush1.msra.mxu0 0.0
    %1287 = vmatprep.subr.mxu0 0.0
    %1288 = vmatpush1.msra.mxu0 0.0
    %1289 = vmatprep.subr.mxu0 0.0
    %1290 = vmatpush1.msra.mxu0 0.0
    %1291 = vmatprep.subr.mxu0 0.0
    %1292 = vmatpush1.msra.mxu0 0.0
    %1293 = vmatprep.subr.mxu0 0.0
    %1294 = vmatpush1.msra.mxu0 0.0
    %1295 = vmatprep.subr.mxu0 0.0
    %1296 = vmatpush1.msra.mxu0 0.0
    %1297 = vmatprep.subr.mxu0 0.0
    %1298 = vmatpush1.msra.mxu0 0.0
    %1299 = vmatprep.mubr.f32.mxu0 0.0
    %v1300 = vand.u32 %v955, 4294901760
    %1301 = vmatmul.mubr.f32.gmra.mrb[0].mxu0 %v1300
    %v1302 = vpop.f32.mrb[0].mxu0
    %v1303 = vadd.f32 %v1071, %v1302
    %v1304 = vpop.f32.mrb[0].mxu0
    %v1305 = vadd.f32 %v1073, %v1304
    %1306 = vdwg.mxu0
    %v1307 = vand.u32 %v50, 4294901760
    %v1308 = vsub.f32 %v50, %v1307
    %1309 = vmatprep.subr.mxu0 %v1308
    %v1310 = vand.u32 %v49, 4294901760
    %v1311 = vsub.f32 %v49, %v1310
    %1312 = vmatpush1.msra.mxu0 %v1311
    %v1313 = vand.u32 %v52, 4294901760
    %v1314 = vsub.f32 %v52, %v1313
    %1315 = vmatprep.subr.mxu0 %v1314
    %v1316 = vand.u32 %v51, 4294901760
    %v1317 = vsub.f32 %v51, %v1316
    %1318 = vmatpush1.msra.mxu0 %v1317
    %v1319 = vand.u32 %v54, 4294901760
    %v1320 = vsub.f32 %v54, %v1319
    %1321 = vmatprep.subr.mxu0 %v1320
    %v1322 = vand.u32 %v53, 4294901760
    %v1323 = vsub.f32 %v53, %v1322
    %1324 = vmatpush1.msra.mxu0 %v1323
    %v1325 = vand.u32 %v56, 4294901760
    %v1326 = vsub.f32 %v56, %v1325
    %1327 = vmatprep.subr.mxu0 %v1326
    %v1328 = vand.u32 %v55, 4294901760
    %v1329 = vsub.f32 %v55, %v1328
    %1330 = vmatpush1.msra.mxu0 %v1329
    %v1331 = vand.u32 %v58, 4294901760
    %v1332 = vsub.f32 %v58, %v1331
    %1333 = vmatprep.subr.mxu0 %v1332
    %v1334 = vand.u32 %v57, 4294901760
    %v1335 = vsub.f32 %v57, %v1334
    %1336 = vmatpush1.msra.mxu0 %v1335
    %v1337 = vand.u32 %v60, 4294901760
    %v1338 = vsub.f32 %v60, %v1337
    %1339 = vmatprep.subr.mxu0 %v1338
    %v1340 = vand.u32 %v59, 4294901760
    %v1341 = vsub.f32 %v59, %v1340
    %1342 = vmatpush1.msra.mxu0 %v1341
    %v1343 = vand.u32 %v62, 4294901760
    %v1344 = vsub.f32 %v62, %v1343
    %1345 = vmatprep.subr.mxu0 %v1344
    %v1346 = vand.u32 %v61, 4294901760
    %v1347 = vsub.f32 %v61, %v1346
    %1348 = vmatpush1.msra.mxu0 %v1347
    %v1349 = vand.u32 %v64, 4294901760
    %v1350 = vsub.f32 %v64, %v1349
    %1351 = vmatprep.subr.mxu0 %v1350
    %v1352 = vand.u32 %v63, 4294901760
    %v1353 = vsub.f32 %v63, %v1352
    %1354 = vmatpush1.msra.mxu0 %v1353
    %v1355 = vand.u32 %v66, 4294901760
    %v1356 = vsub.f32 %v66, %v1355
    %1357 = vmatprep.subr.mxu0 %v1356
    %v1358 = vand.u32 %v65, 4294901760
    %v1359 = vsub.f32 %v65, %v1358
    %1360 = vmatpush1.msra.mxu0 %v1359
    %v1361 = vand.u32 %v68, 4294901760
    %v1362 = vsub.f32 %v68, %v1361
    %1363 = vmatprep.subr.mxu0 %v1362
    %v1364 = vand.u32 %v67, 4294901760
    %v1365 = vsub.f32 %v67, %v1364
    %1366 = vmatpush1.msra.mxu0 %v1365
    %v1367 = vand.u32 %v70, 4294901760
    %v1368 = vsub.f32 %v70, %v1367
    %1369 = vmatprep.subr.mxu0 %v1368
    %v1370 = vand.u32 %v69, 4294901760
    %v1371 = vsub.f32 %v69, %v1370
    %1372 = vmatpush1.msra.mxu0 %v1371
    %v1373 = vand.u32 %v72, 4294901760
    %v1374 = vsub.f32 %v72, %v1373
    %1375 = vmatprep.subr.mxu0 %v1374
    %v1376 = vand.u32 %v71, 4294901760
    %v1377 = vsub.f32 %v71, %v1376
    %1378 = vmatpush1.msra.mxu0 %v1377
    %v1379 = vand.u32 %v74, 4294901760
    %v1380 = vsub.f32 %v74, %v1379
    %1381 = vmatprep.subr.mxu0 %v1380
    %v1382 = vand.u32 %v73, 4294901760
    %v1383 = vsub.f32 %v73, %v1382
    %1384 = vmatpush1.msra.mxu0 %v1383
    %v1385 = vand.u32 %v76, 4294901760
    %v1386 = vsub.f32 %v76, %v1385
    %1387 = vmatprep.subr.mxu0 %v1386
    %v1388 = vand.u32 %v75, 4294901760
    %v1389 = vsub.f32 %v75, %v1388
    %1390 = vmatpush1.msra.mxu0 %v1389
    %v1391 = vand.u32 %v78, 4294901760
    %v1392 = vsub.f32 %v78, %v1391
    %1393 = vmatprep.subr.mxu0 %v1392
    %v1394 = vand.u32 %v77, 4294901760
    %v1395 = vsub.f32 %v77, %v1394
    %1396 = vmatpush1.msra.mxu0 %v1395
    %v1397 = vand.u32 %v80, 4294901760
    %v1398 = vsub.f32 %v80, %v1397
    %1399 = vmatprep.subr.mxu0 %v1398
    %v1400 = vand.u32 %v79, 4294901760
    %v1401 = vsub.f32 %v79, %v1400
    %1402 = vmatpush1.msra.mxu0 %v1401
    %1403 = vmatprep.subr.mxu0 0.0
    %1404 = vmatpush1.msra.mxu0 0.0
    %1405 = vmatprep.subr.mxu0 0.0
    %1406 = vmatpush1.msra.mxu0 0.0
    %1407 = vmatprep.subr.mxu0 0.0
    %1408 = vmatpush1.msra.mxu0 0.0
    %1409 = vmatprep.subr.mxu0 0.0
    %1410 = vmatpush1.msra.mxu0 0.0
    %1411 = vmatprep.subr.mxu0 0.0
    %1412 = vmatpush1.msra.mxu0 0.0
    %1413 = vmatprep.subr.mxu0 0.0
    %1414 = vmatpush1.msra.mxu0 0.0
    %1415 = vmatprep.subr.mxu0 0.0
    %1416 = vmatpush1.msra.mxu0 0.0
    %1417 = vmatprep.subr.mxu0 0.0
    %1418 = vmatpush1.msra.mxu0 0.0
    %1419 = vmatprep.subr.mxu0 0.0
    %1420 = vmatpush1.msra.mxu0 0.0
    %1421 = vmatprep.subr.mxu0 0.0
    %1422 = vmatpush1.msra.mxu0 0.0
    %1423 = vmatprep.subr.mxu0 0.0
    %1424 = vmatpush1.msra.mxu0 0.0
    %1425 = vmatprep.subr.mxu0 0.0
    %1426 = vmatpush1.msra.mxu0 0.0
    %1427 = vmatprep.subr.mxu0 0.0
    %1428 = vmatpush1.msra.mxu0 0.0
    %1429 = vmatprep.subr.mxu0 0.0
    %1430 = vmatpush1.msra.mxu0 0.0
    %1431 = vmatprep.subr.mxu0 0.0
    %1432 = vmatpush1.msra.mxu0 0.0
    %1433 = vmatprep.subr.mxu0 0.0
    %1434 = vmatpush1.msra.mxu0 0.0
    %1435 = vmatprep.mubr.f32.mxu0 0.0
    %v1436 = vand.u32 %v955, 4294901760
    %v1437 = vsub.f32 %v955, %v1436
    %1438 = vmatmul.mubr.f32.gmra.mrb[0].mxu0 %v1437
    %v1439 = vpop.f32.mrb[0].mxu0
    %v1440 = vadd.f32 %v1303, %v1439
    %v1441 = vpop.f32.mrb[0].mxu0
    %v1442 = vadd.f32 %v1305, %v1441
    %1443 = vdwg.mxu0
    %v1444 = vand.u32 %v50, 4294901760
    %1445 = vmatprep.subr.mxu0 %v1444
    %v1446 = vand.u32 %v49, 4294901760
    %1447 = vmatpush1.msra.mxu0 %v1446
    %v1448 = vand.u32 %v52, 4294901760
    %1449 = vmatprep.subr.mxu0 %v1448
    %v1450 = vand.u32 %v51, 4294901760
    %1451 = vmatpush1.msra.mxu0 %v1450
    %v1452 = vand.u32 %v54, 4294901760
    %1453 = vmatprep.subr.mxu0 %v1452
    %v1454 = vand.u32 %v53, 4294901760
    %1455 = vmatpush1.msra.mxu0 %v1454
    %v1456 = vand.u32 %v56, 4294901760
    %1457 = vmatprep.subr.mxu0 %v1456
    %v1458 = vand.u32 %v55, 4294901760
    %1459 = vmatpush1.msra.mxu0 %v1458
    %v1460 = vand.u32 %v58, 4294901760
    %1461 = vmatprep.subr.mxu0 %v1460
    %v1462 = vand.u32 %v57, 4294901760
    %1463 = vmatpush1.msra.mxu0 %v1462
    %v1464 = vand.u32 %v60, 4294901760
    %1465 = vmatprep.subr.mxu0 %v1464
    %v1466 = vand.u32 %v59, 4294901760
    %1467 = vmatpush1.msra.mxu0 %v1466
    %v1468 = vand.u32 %v62, 4294901760
    %1469 = vmatprep.subr.mxu0 %v1468
    %v1470 = vand.u32 %v61, 4294901760
    %1471 = vmatpush1.msra.mxu0 %v1470
    %v1472 = vand.u32 %v64, 4294901760
    %1473 = vmatprep.subr.mxu0 %v1472
    %v1474 = vand.u32 %v63, 4294901760
    %1475 = vmatpush1.msra.mxu0 %v1474
    %v1476 = vand.u32 %v66, 4294901760
    %1477 = vmatprep.subr.mxu0 %v1476
    %v1478 = vand.u32 %v65, 4294901760
    %1479 = vmatpush1.msra.mxu0 %v1478
    %v1480 = vand.u32 %v68, 4294901760
    %1481 = vmatprep.subr.mxu0 %v1480
    %v1482 = vand.u32 %v67, 4294901760
    %1483 = vmatpush1.msra.mxu0 %v1482
    %v1484 = vand.u32 %v70, 4294901760
    %1485 = vmatprep.subr.mxu0 %v1484
    %v1486 = vand.u32 %v69, 4294901760
    %1487 = vmatpush1.msra.mxu0 %v1486
    %v1488 = vand.u32 %v72, 4294901760
    %1489 = vmatprep.subr.mxu0 %v1488
    %v1490 = vand.u32 %v71, 4294901760
    %1491 = vmatpush1.msra.mxu0 %v1490
    %v1492 = vand.u32 %v74, 4294901760
    %1493 = vmatprep.subr.mxu0 %v1492
    %v1494 = vand.u32 %v73, 4294901760
    %1495 = vmatpush1.msra.mxu0 %v1494
    %v1496 = vand.u32 %v76, 4294901760
    %1497 = vmatprep.subr.mxu0 %v1496
    %v1498 = vand.u32 %v75, 4294901760
    %1499 = vmatpush1.msra.mxu0 %v1498
    %v1500 = vand.u32 %v78, 4294901760
    %1501 = vmatprep.subr.mxu0 %v1500
    %v1502 = vand.u32 %v77, 4294901760
    %1503 = vmatpush1.msra.mxu0 %v1502
    %v1504 = vand.u32 %v80, 4294901760
    %1505 = vmatprep.subr.mxu0 %v1504
    %v1506 = vand.u32 %v79, 4294901760
    %1507 = vmatpush1.msra.mxu0 %v1506
    %1508 = vmatprep.subr.mxu0 0.0
    %1509 = vmatpush1.msra.mxu0 0.0
    %1510 = vmatprep.subr.mxu0 0.0
    %1511 = vmatpush1.msra.mxu0 0.0
    %1512 = vmatprep.subr.mxu0 0.0
    %1513 = vmatpush1.msra.mxu0 0.0
    %1514 = vmatprep.subr.mxu0 0.0
    %1515 = vmatpush1.msra.mxu0 0.0
    %1516 = vmatprep.subr.mxu0 0.0
    %1517 = vmatpush1.msra.mxu0 0.0
    %1518 = vmatprep.subr.mxu0 0.0
    %1519 = vmatpush1.msra.mxu0 0.0
    %1520 = vmatprep.subr.mxu0 0.0
    %1521 = vmatpush1.msra.mxu0 0.0
    %1522 = vmatprep.subr.mxu0 0.0
    %1523 = vmatpush1.msra.mxu0 0.0
    %1524 = vmatprep.subr.mxu0 0.0
    %1525 = vmatpush1.msra.mxu0 0.0
    %1526 = vmatprep.subr.mxu0 0.0
    %1527 = vmatpush1.msra.mxu0 0.0
    %1528 = vmatprep.subr.mxu0 0.0
    %1529 = vmatpush1.msra.mxu0 0.0
    %1530 = vmatprep.subr.mxu0 0.0
    %1531 = vmatpush1.msra.mxu0 0.0
    %1532 = vmatprep.subr.mxu0 0.0
    %1533 = vmatpush1.msra.mxu0 0.0
    %1534 = vmatprep.subr.mxu0 0.0
    %1535 = vmatpush1.msra.mxu0 0.0
    %1536 = vmatprep.subr.mxu0 0.0
    %1537 = vmatpush1.msra.mxu0 0.0
    %1538 = vmatprep.subr.mxu0 0.0
    %1539 = vmatpush1.msra.mxu0 0.0
    %1540 = vmatprep.mubr.f32.mxu0 0.0
    %v1541 = vand.u32 %v955, 4294901760
    %v1542 = vsub.f32 %v955, %v1541
    %v1543 = vand.u32 %v1542, 4294901760
    %1544 = vmatmul.mubr.f32.gmra.mrb[0].mxu0 %v1543
    %v1545 = vpop.f32.mrb[0].mxu0
    %v1546 = vadd.f32 %v1440, %v1545
    %v1547 = vpop.f32.mrb[0].mxu0
    %v1548 = vadd.f32 %v1442, %v1547
    %1549 = vdwg.mxu0
    %v1550 = vand.u32 %v50, 4294901760
    %v1551 = vsub.f32 %v50, %v1550
    %v1552 = vand.u32 %v1551, 4294901760
    %1553 = vmatprep.subr.mxu0 %v1552
    %v1554 = vand.u32 %v49, 4294901760
    %v1555 = vsub.f32 %v49, %v1554
    %v1556 = vand.u32 %v1555, 4294901760
    %1557 = vmatpush1.msra.mxu0 %v1556
    %v1558 = vand.u32 %v52, 4294901760
    %v1559 = vsub.f32 %v52, %v1558
    %v1560 = vand.u32 %v1559, 4294901760
    %1561 = vmatprep.subr.mxu0 %v1560
    %v1562 = vand.u32 %v51, 4294901760
    %v1563 = vsub.f32 %v51, %v1562
    %v1564 = vand.u32 %v1563, 4294901760
    %1565 = vmatpush1.msra.mxu0 %v1564
    %v1566 = vand.u32 %v54, 4294901760
    %v1567 = vsub.f32 %v54, %v1566
    %v1568 = vand.u32 %v1567, 4294901760
    %1569 = vmatprep.subr.mxu0 %v1568
    %v1570 = vand.u32 %v53, 4294901760
    %v1571 = vsub.f32 %v53, %v1570
    %v1572 = vand.u32 %v1571, 4294901760
    %1573 = vmatpush1.msra.mxu0 %v1572
    %v1574 = vand.u32 %v56, 4294901760
    %v1575 = vsub.f32 %v56, %v1574
    %v1576 = vand.u32 %v1575, 4294901760
    %1577 = vmatprep.subr.mxu0 %v1576
    %v1578 = vand.u32 %v55, 4294901760
    %v1579 = vsub.f32 %v55, %v1578
    %v1580 = vand.u32 %v1579, 4294901760
    %1581 = vmatpush1.msra.mxu0 %v1580
    %v1582 = vand.u32 %v58, 4294901760
    %v1583 = vsub.f32 %v58, %v1582
    %v1584 = vand.u32 %v1583, 4294901760
    %1585 = vmatprep.subr.mxu0 %v1584
    %v1586 = vand.u32 %v57, 4294901760
    %v1587 = vsub.f32 %v57, %v1586
    %v1588 = vand.u32 %v1587, 4294901760
    %1589 = vmatpush1.msra.mxu0 %v1588
    %v1590 = vand.u32 %v60, 4294901760
    %v1591 = vsub.f32 %v60, %v1590
    %v1592 = vand.u32 %v1591, 4294901760
    %1593 = vmatprep.subr.mxu0 %v1592
    %v1594 = vand.u32 %v59, 4294901760
    %v1595 = vsub.f32 %v59, %v1594
    %v1596 = vand.u32 %v1595, 4294901760
    %1597 = vmatpush1.msra.mxu0 %v1596
    %v1598 = vand.u32 %v62, 4294901760
    %v1599 = vsub.f32 %v62, %v1598
    %v1600 = vand.u32 %v1599, 4294901760
    %1601 = vmatprep.subr.mxu0 %v1600
    %v1602 = vand.u32 %v61, 4294901760
    %v1603 = vsub.f32 %v61, %v1602
    %v1604 = vand.u32 %v1603, 4294901760
    %1605 = vmatpush1.msra.mxu0 %v1604
    %v1606 = vand.u32 %v64, 4294901760
    %v1607 = vsub.f32 %v64, %v1606
    %v1608 = vand.u32 %v1607, 4294901760
    %1609 = vmatprep.subr.mxu0 %v1608
    %v1610 = vand.u32 %v63, 4294901760
    %v1611 = vsub.f32 %v63, %v1610
    %v1612 = vand.u32 %v1611, 4294901760
    %1613 = vmatpush1.msra.mxu0 %v1612
    %v1614 = vand.u32 %v66, 4294901760
    %v1615 = vsub.f32 %v66, %v1614
    %v1616 = vand.u32 %v1615, 4294901760
    %1617 = vmatprep.subr.mxu0 %v1616
    %v1618 = vand.u32 %v65, 4294901760
    %v1619 = vsub.f32 %v65, %v1618
    %v1620 = vand.u32 %v1619, 4294901760
    %1621 = vmatpush1.msra.mxu0 %v1620
    %v1622 = vand.u32 %v68, 4294901760
    %v1623 = vsub.f32 %v68, %v1622
    %v1624 = vand.u32 %v1623, 4294901760
    %1625 = vmatprep.subr.mxu0 %v1624
    %v1626 = vand.u32 %v67, 4294901760
    %v1627 = vsub.f32 %v67, %v1626
    %v1628 = vand.u32 %v1627, 4294901760
    %1629 = vmatpush1.msra.mxu0 %v1628
    %v1630 = vand.u32 %v70, 4294901760
    %v1631 = vsub.f32 %v70, %v1630
    %v1632 = vand.u32 %v1631, 4294901760
    %1633 = vmatprep.subr.mxu0 %v1632
    %v1634 = vand.u32 %v69, 4294901760
    %v1635 = vsub.f32 %v69, %v1634
    %v1636 = vand.u32 %v1635, 4294901760
    %1637 = vmatpush1.msra.mxu0 %v1636
    %v1638 = vand.u32 %v72, 4294901760
    %v1639 = vsub.f32 %v72, %v1638
    %v1640 = vand.u32 %v1639, 4294901760
    %1641 = vmatprep.subr.mxu0 %v1640
    %v1642 = vand.u32 %v71, 4294901760
    %v1643 = vsub.f32 %v71, %v1642
    %v1644 = vand.u32 %v1643, 4294901760
    %1645 = vmatpush1.msra.mxu0 %v1644
    %v1646 = vand.u32 %v74, 4294901760
    %v1647 = vsub.f32 %v74, %v1646
    %v1648 = vand.u32 %v1647, 4294901760
    %1649 = vmatprep.subr.mxu0 %v1648
    %v1650 = vand.u32 %v73, 4294901760
    %v1651 = vsub.f32 %v73, %v1650
    %v1652 = vand.u32 %v1651, 4294901760
    %1653 = vmatpush1.msra.mxu0 %v1652
    %v1654 = vand.u32 %v76, 4294901760
    %v1655 = vsub.f32 %v76, %v1654
    %v1656 = vand.u32 %v1655, 4294901760
    %1657 = vmatprep.subr.mxu0 %v1656
    %v1658 = vand.u32 %v75, 4294901760
    %v1659 = vsub.f32 %v75, %v1658
    %v1660 = vand.u32 %v1659, 4294901760
    %1661 = vmatpush1.msra.mxu0 %v1660
    %v1662 = vand.u32 %v78, 4294901760
    %v1663 = vsub.f32 %v78, %v1662
    %v1664 = vand.u32 %v1663, 4294901760
    %1665 = vmatprep.subr.mxu0 %v1664
    %v1666 = vand.u32 %v77, 4294901760
    %v1667 = vsub.f32 %v77, %v1666
    %v1668 = vand.u32 %v1667, 4294901760
    %1669 = vmatpush1.msra.mxu0 %v1668
    %v1670 = vand.u32 %v80, 4294901760
    %v1671 = vsub.f32 %v80, %v1670
    %v1672 = vand.u32 %v1671, 4294901760
    %1673 = vmatprep.subr.mxu0 %v1672
    %v1674 = vand.u32 %v79, 4294901760
    %v1675 = vsub.f32 %v79, %v1674
    %v1676 = vand.u32 %v1675, 4294901760
    %1677 = vmatpush1.msra.mxu0 %v1676
    %1678 = vmatprep.subr.mxu0 0.0
    %1679 = vmatpush1.msra.mxu0 0.0
    %1680 = vmatprep.subr.mxu0 0.0
    %1681 = vmatpush1.msra.mxu0 0.0
    %1682 = vmatprep.subr.mxu0 0.0
    %1683 = vmatpush1.msra.mxu0 0.0
    %1684 = vmatprep.subr.mxu0 0.0
    %1685 = vmatpush1.msra.mxu0 0.0
    %1686 = vmatprep.subr.mxu0 0.0
    %1687 = vmatpush1.msra.mxu0 0.0
    %1688 = vmatprep.subr.mxu0 0.0
    %1689 = vmatpush1.msra.mxu0 0.0
    %1690 = vmatprep.subr.mxu0 0.0
    %1691 = vmatpush1.msra.mxu0 0.0
    %1692 = vmatprep.subr.mxu0 0.0
    %1693 = vmatpush1.msra.mxu0 0.0
    %1694 = vmatprep.subr.mxu0 0.0
    %1695 = vmatpush1.msra.mxu0 0.0
    %1696 = vmatprep.subr.mxu0 0.0
    %1697 = vmatpush1.msra.mxu0 0.0
    %1698 = vmatprep.subr.mxu0 0.0
    %1699 = vmatpush1.msra.mxu0 0.0
    %1700 = vmatprep.subr.mxu0 0.0
    %1701 = vmatpush1.msra.mxu0 0.0
    %1702 = vmatprep.subr.mxu0 0.0
    %1703 = vmatpush1.msra.mxu0 0.0
    %1704 = vmatprep.subr.mxu0 0.0
    %1705 = vmatpush1.msra.mxu0 0.0
    %1706 = vmatprep.subr.mxu0 0.0
    %1707 = vmatpush1.msra.mxu0 0.0
    %1708 = vmatprep.subr.mxu0 0.0
    %1709 = vmatpush1.msra.mxu0 0.0
    %1710 = vmatprep.mubr.f32.mxu0 0.0
    %v1711 = vand.u32 %v955, 4294901760
    %1712 = vmatmul.mubr.f32.gmra.mrb[0].mxu0 %v1711
    %v1713 = vpop.f32.mrb[0].mxu0
    %v1714 = vadd.f32 %v1546, %v1713
    %v1715 = vpop.f32.mrb[0].mxu0
    %v1716 = vadd.f32 %v1548, %v1715
    %1717 = vdwg.mxu0
    %v1718 = vand.u32 %v50, 4294901760
    %1719 = vmatprep.subr.mxu0 %v1718
    %v1720 = vand.u32 %v49, 4294901760
    %1721 = vmatpush1.msra.mxu0 %v1720
    %v1722 = vand.u32 %v52, 4294901760
    %1723 = vmatprep.subr.mxu0 %v1722
    %v1724 = vand.u32 %v51, 4294901760
    %1725 = vmatpush1.msra.mxu0 %v1724
    %v1726 = vand.u32 %v54, 4294901760
    %1727 = vmatprep.subr.mxu0 %v1726
    %v1728 = vand.u32 %v53, 4294901760
    %1729 = vmatpush1.msra.mxu0 %v1728
    %v1730 = vand.u32 %v56, 4294901760
    %1731 = vmatprep.subr.mxu0 %v1730
    %v1732 = vand.u32 %v55, 4294901760
    %1733 = vmatpush1.msra.mxu0 %v1732
    %v1734 = vand.u32 %v58, 4294901760
    %1735 = vmatprep.subr.mxu0 %v1734
    %v1736 = vand.u32 %v57, 4294901760
    %1737 = vmatpush1.msra.mxu0 %v1736
    %v1738 = vand.u32 %v60, 4294901760
    %1739 = vmatprep.subr.mxu0 %v1738
    %v1740 = vand.u32 %v59, 4294901760
    %1741 = vmatpush1.msra.mxu0 %v1740
    %v1742 = vand.u32 %v62, 4294901760
    %1743 = vmatprep.subr.mxu0 %v1742
    %v1744 = vand.u32 %v61, 4294901760
    %1745 = vmatpush1.msra.mxu0 %v1744
    %v1746 = vand.u32 %v64, 4294901760
    %1747 = vmatprep.subr.mxu0 %v1746
    %v1748 = vand.u32 %v63, 4294901760
    %1749 = vmatpush1.msra.mxu0 %v1748
    %v1750 = vand.u32 %v66, 4294901760
    %1751 = vmatprep.subr.mxu0 %v1750
    %v1752 = vand.u32 %v65, 4294901760
    %1753 = vmatpush1.msra.mxu0 %v1752
    %v1754 = vand.u32 %v68, 4294901760
    %1755 = vmatprep.subr.mxu0 %v1754
    %v1756 = vand.u32 %v67, 4294901760
    %1757 = vmatpush1.msra.mxu0 %v1756
    %v1758 = vand.u32 %v70, 4294901760
    %1759 = vmatprep.subr.mxu0 %v1758
    %v1760 = vand.u32 %v69, 4294901760
    %1761 = vmatpush1.msra.mxu0 %v1760
    %v1762 = vand.u32 %v72, 4294901760
    %1763 = vmatprep.subr.mxu0 %v1762
    %v1764 = vand.u32 %v71, 4294901760
    %1765 = vmatpush1.msra.mxu0 %v1764
    %v1766 = vand.u32 %v74, 4294901760
    %1767 = vmatprep.subr.mxu0 %v1766
    %v1768 = vand.u32 %v73, 4294901760
    %1769 = vmatpush1.msra.mxu0 %v1768
    %v1770 = vand.u32 %v76, 4294901760
    %1771 = vmatprep.subr.mxu0 %v1770
    %v1772 = vand.u32 %v75, 4294901760
    %1773 = vmatpush1.msra.mxu0 %v1772
    %v1774 = vand.u32 %v78, 4294901760
    %1775 = vmatprep.subr.mxu0 %v1774
    %v1776 = vand.u32 %v77, 4294901760
    %1777 = vmatpush1.msra.mxu0 %v1776
    %v1778 = vand.u32 %v80, 4294901760
    %1779 = vmatprep.subr.mxu0 %v1778
    %v1780 = vand.u32 %v79, 4294901760
    %1781 = vmatpush1.msra.mxu0 %v1780
    %1782 = vmatprep.subr.mxu0 0.0
    %1783 = vmatpush1.msra.mxu0 0.0
    %1784 = vmatprep.subr.mxu0 0.0
    %1785 = vmatpush1.msra.mxu0 0.0
    %1786 = vmatprep.subr.mxu0 0.0
    %1787 = vmatpush1.msra.mxu0 0.0
    %1788 = vmatprep.subr.mxu0 0.0
    %1789 = vmatpush1.msra.mxu0 0.0
    %1790 = vmatprep.subr.mxu0 0.0
    %1791 = vmatpush1.msra.mxu0 0.0
    %1792 = vmatprep.subr.mxu0 0.0
    %1793 = vmatpush1.msra.mxu0 0.0
    %1794 = vmatprep.subr.mxu0 0.0
    %1795 = vmatpush1.msra.mxu0 0.0
    %1796 = vmatprep.subr.mxu0 0.0
    %1797 = vmatpush1.msra.mxu0 0.0
    %1798 = vmatprep.subr.mxu0 0.0
    %1799 = vmatpush1.msra.mxu0 0.0
    %1800 = vmatprep.subr.mxu0 0.0
    %1801 = vmatpush1.msra.mxu0 0.0
    %1802 = vmatprep.subr.mxu0 0.0
    %1803 = vmatpush1.msra.mxu0 0.0
    %1804 = vmatprep.subr.mxu0 0.0
    %1805 = vmatpush1.msra.mxu0 0.0
    %1806 = vmatprep.subr.mxu0 0.0
    %1807 = vmatpush1.msra.mxu0 0.0
    %1808 = vmatprep.subr.mxu0 0.0
    %1809 = vmatpush1.msra.mxu0 0.0
    %1810 = vmatprep.subr.mxu0 0.0
    %1811 = vmatpush1.msra.mxu0 0.0
    %1812 = vmatprep.subr.mxu0 0.0
    %1813 = vmatpush1.msra.mxu0 0.0
    %1814 = vmatprep.mubr.f32.mxu0 0.0
    %v1815 = vand.u32 %v955, 4294901760
    %1816 = vmatmul.mubr.f32.gmra.mrb[0].mxu0 %v1815
    %v1817 = vpop.f32.mrb[0].mxu0
    %v1818 = vadd.f32 %v1714, %v1817
    %v1819 = vpop.f32.mrb[0].mxu0
    %v1820 = vadd.f32 %v1716, %v1819
    %1821 = vdwg.mxu0
    %v1822 = vsub.f32 0.0, %v1818
    %v1823 = vsub.f32 0.0, %v1820
    %v1824 = vmul.f32 %v1822, 1.442695
    %v1825 = vpow.pop %v1824
    %v1826 = vmul.f32 %v1823, 1.442695
    %v1827 = vpow.pop %v1826
    %v1828 = vadd.f32 %v1825, 1.0
    %v1829 = vadd.f32 %v1827, 1.0
    %v1830 = vrcp.pop %v1828
    %v1831 = vrcp.pop %v1829
    %v1832 = vand.u32 %v50, 4294901760
    %1833 = vmatprep.subr.mxu0 %v1832
    %v1834 = vand.u32 %v49, 4294901760
    %1835 = vmatpush1.xpose.msra.mxu0 %v1834
    %v1836 = vand.u32 %v52, 4294901760
    %1837 = vmatprep.subr.mxu0 %v1836
    %v1838 = vand.u32 %v51, 4294901760
    %1839 = vmatpush1.xpose.msra.mxu0 %v1838
    %v1840 = vand.u32 %v54, 4294901760
    %1841 = vmatprep.subr.mxu0 %v1840
    %v1842 = vand.u32 %v53, 4294901760
    %1843 = vmatpush1.xpose.msra.mxu0 %v1842
    %v1844 = vand.u32 %v56, 4294901760
    %1845 = vmatprep.subr.mxu0 %v1844
    %v1846 = vand.u32 %v55, 4294901760
    %1847 = vmatpush1.xpose.msra.mxu0 %v1846
    %v1848 = vand.u32 %v58, 4294901760
    %1849 = vmatprep.subr.mxu0 %v1848
    %v1850 = vand.u32 %v57, 4294901760
    %1851 = vmatpush1.xpose.msra.mxu0 %v1850
    %v1852 = vand.u32 %v60, 4294901760
    %1853 = vmatprep.subr.mxu0 %v1852
    %v1854 = vand.u32 %v59, 4294901760
    %1855 = vmatpush1.xpose.msra.mxu0 %v1854
    %v1856 = vand.u32 %v62, 4294901760
    %1857 = vmatprep.subr.mxu0 %v1856
    %v1858 = vand.u32 %v61, 4294901760
    %1859 = vmatpush1.xpose.msra.mxu0 %v1858
    %v1860 = vand.u32 %v64, 4294901760
    %1861 = vmatprep.subr.mxu0 %v1860
    %v1862 = vand.u32 %v63, 4294901760
    %1863 = vmatpush1.xpose.msra.mxu0 %v1862
    %v1864 = vand.u32 %v66, 4294901760
    %1865 = vmatprep.subr.mxu0 %v1864
    %v1866 = vand.u32 %v65, 4294901760
    %1867 = vmatpush1.xpose.msra.mxu0 %v1866
    %v1868 = vand.u32 %v68, 4294901760
    %1869 = vmatprep.subr.mxu0 %v1868
    %v1870 = vand.u32 %v67, 4294901760
    %1871 = vmatpush1.xpose.msra.mxu0 %v1870
    %v1872 = vand.u32 %v70, 4294901760
    %1873 = vmatprep.subr.mxu0 %v1872
    %v1874 = vand.u32 %v69, 4294901760
    %1875 = vmatpush1.xpose.msra.mxu0 %v1874
    %v1876 = vand.u32 %v72, 4294901760
    %1877 = vmatprep.subr.mxu0 %v1876
    %v1878 = vand.u32 %v71, 4294901760
    %1879 = vmatpush1.xpose.msra.mxu0 %v1878
    %v1880 = vand.u32 %v74, 4294901760
    %1881 = vmatprep.subr.mxu0 %v1880
    %v1882 = vand.u32 %v73, 4294901760
    %1883 = vmatpush1.xpose.msra.mxu0 %v1882
    %v1884 = vand.u32 %v76, 4294901760
    %1885 = vmatprep.subr.mxu0 %v1884
    %v1886 = vand.u32 %v75, 4294901760
    %1887 = vmatpush1.xpose.msra.mxu0 %v1886
    %v1888 = vand.u32 %v78, 4294901760
    %1889 = vmatprep.subr.mxu0 %v1888
    %v1890 = vand.u32 %v77, 4294901760
    %1891 = vmatpush1.xpose.msra.mxu0 %v1890
    %v1892 = vand.u32 %v80, 4294901760
    %1893 = vmatprep.subr.mxu0 %v1892
    %v1894 = vand.u32 %v79, 4294901760
    %1895 = vmatpush1.xpose.msra.mxu0 %v1894
    %1896 = vmatprep.subr.mxu0 0.0
    %1897 = vmatpush1.xpose.msra.mxu0 0.0
    %1898 = vmatprep.subr.mxu0 0.0
    %1899 = vmatpush1.xpose.msra.mxu0 0.0
    %1900 = vmatprep.subr.mxu0 0.0
    %1901 = vmatpush1.xpose.msra.mxu0 0.0
    %1902 = vmatprep.subr.mxu0 0.0
    %1903 = vmatpush1.xpose.msra.mxu0 0.0
    %1904 = vmatprep.subr.mxu0 0.0
    %1905 = vmatpush1.xpose.msra.mxu0 0.0
    %1906 = vmatprep.subr.mxu0 0.0
    %1907 = vmatpush1.xpose.msra.mxu0 0.0
    %1908 = vmatprep.subr.mxu0 0.0
    %1909 = vmatpush1.xpose.msra.mxu0 0.0
    %1910 = vmatprep.subr.mxu0 0.0
    %1911 = vmatpush1.xpose.msra.mxu0 0.0
    %1912 = vmatprep.subr.mxu0 0.0
    %1913 = vmatpush1.xpose.msra.mxu0 0.0
    %1914 = vmatprep.subr.mxu0 0.0
    %1915 = vmatpush1.xpose.msra.mxu0 0.0
    %1916 = vmatprep.subr.mxu0 0.0
    %1917 = vmatpush1.xpose.msra.mxu0 0.0
    %1918 = vmatprep.subr.mxu0 0.0
    %1919 = vmatpush1.xpose.msra.mxu0 0.0
    %1920 = vmatprep.subr.mxu0 0.0
    %1921 = vmatpush1.xpose.msra.mxu0 0.0
    %1922 = vmatprep.subr.mxu0 0.0
    %1923 = vmatpush1.xpose.msra.mxu0 0.0
    %1924 = vmatprep.subr.mxu0 0.0
    %1925 = vmatpush1.xpose.msra.mxu0 0.0
    %1926 = vmatprep.subr.mxu0 0.0
    %1927 = vmatpush1.xpose.msra.mxu0 0.0
    %v1928 = vand.u32 %v1831, 4294901760
    %v1929 = vsub.f32 %v1831, %v1928
    %v1930 = vand.u32 %v1929, 4294901760
    %v1931 = vsub.f32 %v1929, %v1930
    %v1932 = vand.u32 %v1931, 4294901760
    %1933 = vmatprep.mubr.f32.mxu0 %v1932
    %v1934 = vand.u32 %v1830, 4294901760
    %v1935 = vsub.f32 %v1830, %v1934
    %v1936 = vand.u32 %v1935, 4294901760
    %v1937 = vsub.f32 %v1935, %v1936
    %v1938 = vand.u32 %v1937, 4294901760
    %1939 = vmatmul.mubr.f32.gmra.mrb[0].mxu0 %v1938
    %v1940 = vpop.f32.mrb[0].mxu0
    %v1941 = vadd.f32 %v87, %v1940
    %v1942 = vpop.f32.mrb[0].mxu0
    %1943 = vdwg.mxu0
    %v1944 = vand.u32 %v50, 4294901760
    %v1945 = vsub.f32 %v50, %v1944
    %v1946 = vand.u32 %v1945, 4294901760
    %v1947 = vsub.f32 %v1945, %v1946
    %v1948 = vand.u32 %v1947, 4294901760
    %1949 = vmatprep.subr.mxu0 %v1948
    %v1950 = vand.u32 %v49, 4294901760
    %v1951 = vsub.f32 %v49, %v1950
    %v1952 = vand.u32 %v1951, 4294901760
    %v1953 = vsub.f32 %v1951, %v1952
    %v1954 = vand.u32 %v1953, 4294901760
    %1955 = vmatpush1.xpose.msra.mxu0 %v1954
    %v1956 = vand.u32 %v52, 4294901760
    %v1957 = vsub.f32 %v52, %v1956
    %v1958 = vand.u32 %v1957, 4294901760
    %v1959 = vsub.f32 %v1957, %v1958
    %v1960 = vand.u32 %v1959, 4294901760
    %1961 = vmatprep.subr.mxu0 %v1960
    %v1962 = vand.u32 %v51, 4294901760
    %v1963 = vsub.f32 %v51, %v1962
    %v1964 = vand.u32 %v1963, 4294901760
    %v1965 = vsub.f32 %v1963, %v1964
    %v1966 = vand.u32 %v1965, 4294901760
    %1967 = vmatpush1.xpose.msra.mxu0 %v1966
    %v1968 = vand.u32 %v54, 4294901760
    %v1969 = vsub.f32 %v54, %v1968
    %v1970 = vand.u32 %v1969, 4294901760
    %v1971 = vsub.f32 %v1969, %v1970
    %v1972 = vand.u32 %v1971, 4294901760
    %1973 = vmatprep.subr.mxu0 %v1972
    %v1974 = vand.u32 %v53, 4294901760
    %v1975 = vsub.f32 %v53, %v1974
    %v1976 = vand.u32 %v1975, 4294901760
    %v1977 = vsub.f32 %v1975, %v1976
    %v1978 = vand.u32 %v1977, 4294901760
    %1979 = vmatpush1.xpose.msra.mxu0 %v1978
    %v1980 = vand.u32 %v56, 4294901760
    %v1981 = vsub.f32 %v56, %v1980
    %v1982 = vand.u32 %v1981, 4294901760
    %v1983 = vsub.f32 %v1981, %v1982
    %v1984 = vand.u32 %v1983, 4294901760
    %1985 = vmatprep.subr.mxu0 %v1984
    %v1986 = vand.u32 %v55, 4294901760
    %v1987 = vsub.f32 %v55, %v1986
    %v1988 = vand.u32 %v1987, 4294901760
    %v1989 = vsub.f32 %v1987, %v1988
    %v1990 = vand.u32 %v1989, 4294901760
    %1991 = vmatpush1.xpose.msra.mxu0 %v1990
    %v1992 = vand.u32 %v58, 4294901760
    %v1993 = vsub.f32 %v58, %v1992
    %v1994 = vand.u32 %v1993, 4294901760
    %v1995 = vsub.f32 %v1993, %v1994
    %v1996 = vand.u32 %v1995, 4294901760
    %1997 = vmatprep.subr.mxu0 %v1996
    %v1998 = vand.u32 %v57, 4294901760
    %v1999 = vsub.f32 %v57, %v1998
    %v2000 = vand.u32 %v1999, 4294901760
    %v2001 = vsub.f32 %v1999, %v2000
    %v2002 = vand.u32 %v2001, 4294901760
    %2003 = vmatpush1.xpose.msra.mxu0 %v2002
    %v2004 = vand.u32 %v60, 4294901760
    %v2005 = vsub.f32 %v60, %v2004
    %v2006 = vand.u32 %v2005, 4294901760
    %v2007 = vsub.f32 %v2005, %v2006
    %v2008 = vand.u32 %v2007, 4294901760
    %2009 = vmatprep.subr.mxu0 %v2008
    %v2010 = vand.u32 %v59, 4294901760
    %v2011 = vsub.f32 %v59, %v2010
    %v2012 = vand.u32 %v2011, 4294901760
    %v2013 = vsub.f32 %v2011, %v2012
    %v2014 = vand.u32 %v2013, 4294901760
    %2015 = vmatpush1.xpose.msra.mxu0 %v2014
    %v2016 = vand.u32 %v62, 4294901760
    %v2017 = vsub.f32 %v62, %v2016
    %v2018 = vand.u32 %v2017, 4294901760
    %v2019 = vsub.f32 %v2017, %v2018
    %v2020 = vand.u32 %v2019, 4294901760
    %2021 = vmatprep.subr.mxu0 %v2020
    %v2022 = vand.u32 %v61, 4294901760
    %v2023 = vsub.f32 %v61, %v2022
    %v2024 = vand.u32 %v2023, 4294901760
    %v2025 = vsub.f32 %v2023, %v2024
    %v2026 = vand.u32 %v2025, 4294901760
    %2027 = vmatpush1.xpose.msra.mxu0 %v2026
    %v2028 = vand.u32 %v64, 4294901760
    %v2029 = vsub.f32 %v64, %v2028
    %v2030 = vand.u32 %v2029, 4294901760
    %v2031 = vsub.f32 %v2029, %v2030
    %v2032 = vand.u32 %v2031, 4294901760
    %2033 = vmatprep.subr.mxu0 %v2032
    %v2034 = vand.u32 %v63, 4294901760
    %v2035 = vsub.f32 %v63, %v2034
    %v2036 = vand.u32 %v2035, 4294901760
    %v2037 = vsub.f32 %v2035, %v2036
    %v2038 = vand.u32 %v2037, 4294901760
    %2039 = vmatpush1.xpose.msra.mxu0 %v2038
    %v2040 = vand.u32 %v66, 4294901760
    %v2041 = vsub.f32 %v66, %v2040
    %v2042 = vand.u32 %v2041, 4294901760
    %v2043 = vsub.f32 %v2041, %v2042
    %v2044 = vand.u32 %v2043, 4294901760
    %2045 = vmatprep.subr.mxu0 %v2044
    %v2046 = vand.u32 %v65, 4294901760
    %v2047 = vsub.f32 %v65, %v2046
    %v2048 = vand.u32 %v2047, 4294901760
    %v2049 = vsub.f32 %v2047, %v2048
    %v2050 = vand.u32 %v2049, 4294901760
    %2051 = vmatpush1.xpose.msra.mxu0 %v2050
    %v2052 = vand.u32 %v68, 4294901760
    %v2053 = vsub.f32 %v68, %v2052
    %v2054 = vand.u32 %v2053, 4294901760
    %v2055 = vsub.f32 %v2053, %v2054
    %v2056 = vand.u32 %v2055, 4294901760
    %2057 = vmatprep.subr.mxu0 %v2056
    %v2058 = vand.u32 %v67, 4294901760
    %v2059 = vsub.f32 %v67, %v2058
    %v2060 = vand.u32 %v2059, 4294901760
    %v2061 = vsub.f32 %v2059, %v2060
    %v2062 = vand.u32 %v2061, 4294901760
    %2063 = vmatpush1.xpose.msra.mxu0 %v2062
    %v2064 = vand.u32 %v70, 4294901760
    %v2065 = vsub.f32 %v70, %v2064
    %v2066 = vand.u32 %v2065, 4294901760
    %v2067 = vsub.f32 %v2065, %v2066
    %v2068 = vand.u32 %v2067, 4294901760
    %2069 = vmatprep.subr.mxu0 %v2068
    %v2070 = vand.u32 %v69, 4294901760
    %v2071 = vsub.f32 %v69, %v2070
    %v2072 = vand.u32 %v2071, 4294901760
    %v2073 = vsub.f32 %v2071, %v2072
    %v2074 = vand.u32 %v2073, 4294901760
    %2075 = vmatpush1.xpose.msra.mxu0 %v2074
    %v2076 = vand.u32 %v72, 4294901760
    %v2077 = vsub.f32 %v72, %v2076
    %v2078 = vand.u32 %v2077, 4294901760
    %v2079 = vsub.f32 %v2077, %v2078
    %v2080 = vand.u32 %v2079, 4294901760
    %2081 = vmatprep.subr.mxu0 %v2080
    %v2082 = vand.u32 %v71, 4294901760
    %v2083 = vsub.f32 %v71, %v2082
    %v2084 = vand.u32 %v2083, 4294901760
    %v2085 = vsub.f32 %v2083, %v2084
    %v2086 = vand.u32 %v2085, 4294901760
    %2087 = vmatpush1.xpose.msra.mxu0 %v2086
    %v2088 = vand.u32 %v74, 4294901760
    %v2089 = vsub.f32 %v74, %v2088
    %v2090 = vand.u32 %v2089, 4294901760
    %v2091 = vsub.f32 %v2089, %v2090
    %v2092 = vand.u32 %v2091, 4294901760
    %2093 = vmatprep.subr.mxu0 %v2092
    %v2094 = vand.u32 %v73, 4294901760
    %v2095 = vsub.f32 %v73, %v2094
    %v2096 = vand.u32 %v2095, 4294901760
    %v2097 = vsub.f32 %v2095, %v2096
    %v2098 = vand.u32 %v2097, 4294901760
    %2099 = vmatpush1.xpose.msra.mxu0 %v2098
    %v2100 = vand.u32 %v76, 4294901760
    %v2101 = vsub.f32 %v76, %v2100
    %v2102 = vand.u32 %v2101, 4294901760
    %v2103 = vsub.f32 %v2101, %v2102
    %v2104 = vand.u32 %v2103, 4294901760
    %2105 = vmatprep.subr.mxu0 %v2104
    %v2106 = vand.u32 %v75, 4294901760
    %v2107 = vsub.f32 %v75, %v2106
    %v2108 = vand.u32 %v2107, 4294901760
    %v2109 = vsub.f32 %v2107, %v2108
    %v2110 = vand.u32 %v2109, 4294901760
    %2111 = vmatpush1.xpose.msra.mxu0 %v2110
    %v2112 = vand.u32 %v78, 4294901760
    %v2113 = vsub.f32 %v78, %v2112
    %v2114 = vand.u32 %v2113, 4294901760
    %v2115 = vsub.f32 %v2113, %v2114
    %v2116 = vand.u32 %v2115, 4294901760
    %2117 = vmatprep.subr.mxu0 %v2116
    %v2118 = vand.u32 %v77, 4294901760
    %v2119 = vsub.f32 %v77, %v2118
    %v2120 = vand.u32 %v2119, 4294901760
    %v2121 = vsub.f32 %v2119, %v2120
    %v2122 = vand.u32 %v2121, 4294901760
    %2123 = vmatpush1.xpose.msra.mxu0 %v2122
    %v2124 = vand.u32 %v80, 4294901760
    %v2125 = vsub.f32 %v80, %v2124
    %v2126 = vand.u32 %v2125, 4294901760
    %v2127 = vsub.f32 %v2125, %v2126
    %v2128 = vand.u32 %v2127, 4294901760
    %2129 = vmatprep.subr.mxu0 %v2128
    %v2130 = vand.u32 %v79, 4294901760
    %v2131 = vsub.f32 %v79, %v2130
    %v2132 = vand.u32 %v2131, 4294901760
    %v2133 = vsub.f32 %v2131, %v2132
    %v2134 = vand.u32 %v2133, 4294901760
    %2135 = vmatpush1.xpose.msra.mxu0 %v2134
    %2136 = vmatprep.subr.mxu0 0.0
    %2137 = vmatpush1.xpose.msra.mxu0 0.0
    %2138 = vmatprep.subr.mxu0 0.0
    %2139 = vmatpush1.xpose.msra.mxu0 0.0
    %2140 = vmatprep.subr.mxu0 0.0
    %2141 = vmatpush1.xpose.msra.mxu0 0.0
    %2142 = vmatprep.subr.mxu0 0.0
    %2143 = vmatpush1.xpose.msra.mxu0 0.0
    %2144 = vmatprep.subr.mxu0 0.0
    %2145 = vmatpush1.xpose.msra.mxu0 0.0
    %2146 = vmatprep.subr.mxu0 0.0
    %2147 = vmatpush1.xpose.msra.mxu0 0.0
    %2148 = vmatprep.subr.mxu0 0.0
    %2149 = vmatpush1.xpose.msra.mxu0 0.0
    %2150 = vmatprep.subr.mxu0 0.0
    %2151 = vmatpush1.xpose.msra.mxu0 0.0
    %2152 = vmatprep.subr.mxu0 0.0
    %2153 = vmatpush1.xpose.msra.mxu0 0.0
    %2154 = vmatprep.subr.mxu0 0.0
    %2155 = vmatpush1.xpose.msra.mxu0 0.0
    %2156 = vmatprep.subr.mxu0 0.0
    %2157 = vmatpush1.xpose.msra.mxu0 0.0
    %2158 = vmatprep.subr.mxu0 0.0
    %2159 = vmatpush1.xpose.msra.mxu0 0.0
    %2160 = vmatprep.subr.mxu0 0.0
    %2161 = vmatpush1.xpose.msra.mxu0 0.0
    %2162 = vmatprep.subr.mxu0 0.0
    %2163 = vmatpush1.xpose.msra.mxu0 0.0
    %2164 = vmatprep.subr.mxu0 0.0
    %2165 = vmatpush1.xpose.msra.mxu0 0.0
    %2166 = vmatprep.subr.mxu0 0.0
    %2167 = vmatpush1.xpose.msra.mxu0 0.0
    %v2168 = vand.u32 %v1831, 4294901760
    %2169 = vmatprep.mubr.f32.mxu0 %v2168
    %v2170 = vand.u32 %v1830, 4294901760
    %2171 = vmatmul.mubr.f32.gmra.mrb[0].mxu0 %v2170
    %v2172 = vpop.f32.mrb[0].mxu0
    %v2173 = vadd.f32 %v1941, %v2172
    %v2174 = vpop.f32.mrb[0].mxu0
    %2175 = vdwg.mxu0
    %v2176 = vand.u32 %v50, 4294901760
    %v2177 = vsub.f32 %v50, %v2176
    %2178 = vmatprep.subr.mxu0 %v2177
    %v2179 = vand.u32 %v49, 4294901760
    %v2180 = vsub.f32 %v49, %v2179
    %2181 = vmatpush1.xpose.msra.mxu0 %v2180
    %v2182 = vand.u32 %v52, 4294901760
    %v2183 = vsub.f32 %v52, %v2182
    %2184 = vmatprep.subr.mxu0 %v2183
    %v2185 = vand.u32 %v51, 4294901760
    %v2186 = vsub.f32 %v51, %v2185
    %2187 = vmatpush1.xpose.msra.mxu0 %v2186
    %v2188 = vand.u32 %v54, 4294901760
    %v2189 = vsub.f32 %v54, %v2188
    %2190 = vmatprep.subr.mxu0 %v2189
    %v2191 = vand.u32 %v53, 4294901760
    %v2192 = vsub.f32 %v53, %v2191
    %2193 = vmatpush1.xpose.msra.mxu0 %v2192
    %v2194 = vand.u32 %v56, 4294901760
    %v2195 = vsub.f32 %v56, %v2194
    %2196 = vmatprep.subr.mxu0 %v2195
    %v2197 = vand.u32 %v55, 4294901760
    %v2198 = vsub.f32 %v55, %v2197
    %2199 = vmatpush1.xpose.msra.mxu0 %v2198
    %v2200 = vand.u32 %v58, 4294901760
    %v2201 = vsub.f32 %v58, %v2200
    %2202 = vmatprep.subr.mxu0 %v2201
    %v2203 = vand.u32 %v57, 4294901760
    %v2204 = vsub.f32 %v57, %v2203
    %2205 = vmatpush1.xpose.msra.mxu0 %v2204
    %v2206 = vand.u32 %v60, 4294901760
    %v2207 = vsub.f32 %v60, %v2206
    %2208 = vmatprep.subr.mxu0 %v2207
    %v2209 = vand.u32 %v59, 4294901760
    %v2210 = vsub.f32 %v59, %v2209
    %2211 = vmatpush1.xpose.msra.mxu0 %v2210
    %v2212 = vand.u32 %v62, 4294901760
    %v2213 = vsub.f32 %v62, %v2212
    %2214 = vmatprep.subr.mxu0 %v2213
    %v2215 = vand.u32 %v61, 4294901760
    %v2216 = vsub.f32 %v61, %v2215
    %2217 = vmatpush1.xpose.msra.mxu0 %v2216
    %v2218 = vand.u32 %v64, 4294901760
    %v2219 = vsub.f32 %v64, %v2218
    %2220 = vmatprep.subr.mxu0 %v2219
    %v2221 = vand.u32 %v63, 4294901760
    %v2222 = vsub.f32 %v63, %v2221
    %2223 = vmatpush1.xpose.msra.mxu0 %v2222
    %v2224 = vand.u32 %v66, 4294901760
    %v2225 = vsub.f32 %v66, %v2224
    %2226 = vmatprep.subr.mxu0 %v2225
    %v2227 = vand.u32 %v65, 4294901760
    %v2228 = vsub.f32 %v65, %v2227
    %2229 = vmatpush1.xpose.msra.mxu0 %v2228
    %v2230 = vand.u32 %v68, 4294901760
    %v2231 = vsub.f32 %v68, %v2230
    %2232 = vmatprep.subr.mxu0 %v2231
    %v2233 = vand.u32 %v67, 4294901760
    %v2234 = vsub.f32 %v67, %v2233
    %2235 = vmatpush1.xpose.msra.mxu0 %v2234
    %v2236 = vand.u32 %v70, 4294901760
    %v2237 = vsub.f32 %v70, %v2236
    %2238 = vmatprep.subr.mxu0 %v2237
    %v2239 = vand.u32 %v69, 4294901760
    %v2240 = vsub.f32 %v69, %v2239
    %2241 = vmatpush1.xpose.msra.mxu0 %v2240
    %v2242 = vand.u32 %v72, 4294901760
    %v2243 = vsub.f32 %v72, %v2242
    %2244 = vmatprep.subr.mxu0 %v2243
    %v2245 = vand.u32 %v71, 4294901760
    %v2246 = vsub.f32 %v71, %v2245
    %2247 = vmatpush1.xpose.msra.mxu0 %v2246
    %v2248 = vand.u32 %v74, 4294901760
    %v2249 = vsub.f32 %v74, %v2248
    %2250 = vmatprep.subr.mxu0 %v2249
    %v2251 = vand.u32 %v73, 4294901760
    %v2252 = vsub.f32 %v73, %v2251
    %2253 = vmatpush1.xpose.msra.mxu0 %v2252
    %v2254 = vand.u32 %v76, 4294901760
    %v2255 = vsub.f32 %v76, %v2254
    %2256 = vmatprep.subr.mxu0 %v2255
    %v2257 = vand.u32 %v75, 4294901760
    %v2258 = vsub.f32 %v75, %v2257
    %2259 = vmatpush1.xpose.msra.mxu0 %v2258
    %v2260 = vand.u32 %v78, 4294901760
    %v2261 = vsub.f32 %v78, %v2260
    %2262 = vmatprep.subr.mxu0 %v2261
    %v2263 = vand.u32 %v77, 4294901760
    %v2264 = vsub.f32 %v77, %v2263
    %2265 = vmatpush1.xpose.msra.mxu0 %v2264
    %v2266 = vand.u32 %v80, 4294901760
    %v2267 = vsub.f32 %v80, %v2266
    %2268 = vmatprep.subr.mxu0 %v2267
    %v2269 = vand.u32 %v79, 4294901760
    %v2270 = vsub.f32 %v79, %v2269
    %2271 = vmatpush1.xpose.msra.mxu0 %v2270
    %2272 = vmatprep.subr.mxu0 0.0
    %2273 = vmatpush1.xpose.msra.mxu0 0.0
    %2274 = vmatprep.subr.mxu0 0.0
    %2275 = vmatpush1.xpose.msra.mxu0 0.0
    %2276 = vmatprep.subr.mxu0 0.0
    %2277 = vmatpush1.xpose.msra.mxu0 0.0
    %2278 = vmatprep.subr.mxu0 0.0
    %2279 = vmatpush1.xpose.msra.mxu0 0.0
    %2280 = vmatprep.subr.mxu0 0.0
    %2281 = vmatpush1.xpose.msra.mxu0 0.0
    %2282 = vmatprep.subr.mxu0 0.0
    %2283 = vmatpush1.xpose.msra.mxu0 0.0
    %2284 = vmatprep.subr.mxu0 0.0
    %2285 = vmatpush1.xpose.msra.mxu0 0.0
    %2286 = vmatprep.subr.mxu0 0.0
    %2287 = vmatpush1.xpose.msra.mxu0 0.0
    %2288 = vmatprep.subr.mxu0 0.0
    %2289 = vmatpush1.xpose.msra.mxu0 0.0
    %2290 = vmatprep.subr.mxu0 0.0
    %2291 = vmatpush1.xpose.msra.mxu0 0.0
    %2292 = vmatprep.subr.mxu0 0.0
    %2293 = vmatpush1.xpose.msra.mxu0 0.0
    %2294 = vmatprep.subr.mxu0 0.0
    %2295 = vmatpush1.xpose.msra.mxu0 0.0
    %2296 = vmatprep.subr.mxu0 0.0
    %2297 = vmatpush1.xpose.msra.mxu0 0.0
    %2298 = vmatprep.subr.mxu0 0.0
    %2299 = vmatpush1.xpose.msra.mxu0 0.0
    %2300 = vmatprep.subr.mxu0 0.0
    %2301 = vmatpush1.xpose.msra.mxu0 0.0
    %2302 = vmatprep.subr.mxu0 0.0
    %2303 = vmatpush1.xpose.msra.mxu0 0.0
    %v2304 = vand.u32 %v1831, 4294901760
    %v2305 = vsub.f32 %v1831, %v2304
    %2306 = vmatprep.mubr.f32.mxu0 %v2305
    %v2307 = vand.u32 %v1830, 4294901760
    %v2308 = vsub.f32 %v1830, %v2307
    %2309 = vmatmul.mubr.f32.gmra.mrb[0].mxu0 %v2308
    %v2310 = vpop.f32.mrb[0].mxu0
    %v2311 = vadd.f32 %v2173, %v2310
    %v2312 = vpop.f32.mrb[0].mxu0
    %2313 = vdwg.mxu0
    %v2314 = vand.u32 %v50, 4294901760
    %2315 = vmatprep.subr.mxu0 %v2314
    %v2316 = vand.u32 %v49, 4294901760
    %2317 = vmatpush1.xpose.msra.mxu0 %v2316
    %v2318 = vand.u32 %v52, 4294901760
    %2319 = vmatprep.subr.mxu0 %v2318
    %v2320 = vand.u32 %v51, 4294901760
    %2321 = vmatpush1.xpose.msra.mxu0 %v2320
    %v2322 = vand.u32 %v54, 4294901760
    %2323 = vmatprep.subr.mxu0 %v2322
    %v2324 = vand.u32 %v53, 4294901760
    %2325 = vmatpush1.xpose.msra.mxu0 %v2324
    %v2326 = vand.u32 %v56, 4294901760
    %2327 = vmatprep.subr.mxu0 %v2326
    %v2328 = vand.u32 %v55, 4294901760
    %2329 = vmatpush1.xpose.msra.mxu0 %v2328
    %v2330 = vand.u32 %v58, 4294901760
    %2331 = vmatprep.subr.mxu0 %v2330
    %v2332 = vand.u32 %v57, 4294901760
    %2333 = vmatpush1.xpose.msra.mxu0 %v2332
    %v2334 = vand.u32 %v60, 4294901760
    %2335 = vmatprep.subr.mxu0 %v2334
    %v2336 = vand.u32 %v59, 4294901760
    %2337 = vmatpush1.xpose.msra.mxu0 %v2336
    %v2338 = vand.u32 %v62, 4294901760
    %2339 = vmatprep.subr.mxu0 %v2338
    %v2340 = vand.u32 %v61, 4294901760
    %2341 = vmatpush1.xpose.msra.mxu0 %v2340
    %v2342 = vand.u32 %v64, 4294901760
    %2343 = vmatprep.subr.mxu0 %v2342
    %v2344 = vand.u32 %v63, 4294901760
    %2345 = vmatpush1.xpose.msra.mxu0 %v2344
    %v2346 = vand.u32 %v66, 4294901760
    %2347 = vmatprep.subr.mxu0 %v2346
    %v2348 = vand.u32 %v65, 4294901760
    %2349 = vmatpush1.xpose.msra.mxu0 %v2348
    %v2350 = vand.u32 %v68, 4294901760
    %2351 = vmatprep.subr.mxu0 %v2350
    %v2352 = vand.u32 %v67, 4294901760
    %2353 = vmatpush1.xpose.msra.mxu0 %v2352
    %v2354 = vand.u32 %v70, 4294901760
    %2355 = vmatprep.subr.mxu0 %v2354
    %v2356 = vand.u32 %v69, 4294901760
    %2357 = vmatpush1.xpose.msra.mxu0 %v2356
    %v2358 = vand.u32 %v72, 4294901760
    %2359 = vmatprep.subr.mxu0 %v2358
    %v2360 = vand.u32 %v71, 4294901760
    %2361 = vmatpush1.xpose.msra.mxu0 %v2360
    %v2362 = vand.u32 %v74, 4294901760
    %2363 = vmatprep.subr.mxu0 %v2362
    %v2364 = vand.u32 %v73, 4294901760
    %2365 = vmatpush1.xpose.msra.mxu0 %v2364
    %v2366 = vand.u32 %v76, 4294901760
    %2367 = vmatprep.subr.mxu0 %v2366
    %v2368 = vand.u32 %v75, 4294901760
    %2369 = vmatpush1.xpose.msra.mxu0 %v2368
    %v2370 = vand.u32 %v78, 4294901760
    %2371 = vmatprep.subr.mxu0 %v2370
    %v2372 = vand.u32 %v77, 4294901760
    %2373 = vmatpush1.xpose.msra.mxu0 %v2372
    %v2374 = vand.u32 %v80, 4294901760
    %2375 = vmatprep.subr.mxu0 %v2374
    %v2376 = vand.u32 %v79, 4294901760
    %2377 = vmatpush1.xpose.msra.mxu0 %v2376
    %2378 = vmatprep.subr.mxu0 0.0
    %2379 = vmatpush1.xpose.msra.mxu0 0.0
    %2380 = vmatprep.subr.mxu0 0.0
    %2381 = vmatpush1.xpose.msra.mxu0 0.0
    %2382 = vmatprep.subr.mxu0 0.0
    %2383 = vmatpush1.xpose.msra.mxu0 0.0
    %2384 = vmatprep.subr.mxu0 0.0
    %2385 = vmatpush1.xpose.msra.mxu0 0.0
    %2386 = vmatprep.subr.mxu0 0.0
    %2387 = vmatpush1.xpose.msra.mxu0 0.0
    %2388 = vmatprep.subr.mxu0 0.0
    %2389 = vmatpush1.xpose.msra.mxu0 0.0
    %2390 = vmatprep.subr.mxu0 0.0
    %2391 = vmatpush1.xpose.msra.mxu0 0.0
    %2392 = vmatprep.subr.mxu0 0.0
    %2393 = vmatpush1.xpose.msra.mxu0 0.0
    %2394 = vmatprep.subr.mxu0 0.0
    %2395 = vmatpush1.xpose.msra.mxu0 0.0
    %2396 = vmatprep.subr.mxu0 0.0
    %2397 = vmatpush1.xpose.msra.mxu0 0.0
    %2398 = vmatprep.subr.mxu0 0.0
    %2399 = vmatpush1.xpose.msra.mxu0 0.0
    %2400 = vmatprep.subr.mxu0 0.0
    %2401 = vmatpush1.xpose.msra.mxu0 0.0
    %2402 = vmatprep.subr.mxu0 0.0
    %2403 = vmatpush1.xpose.msra.mxu0 0.0
    %2404 = vmatprep.subr.mxu0 0.0
    %2405 = vmatpush1.xpose.msra.mxu0 0.0
    %2406 = vmatprep.subr.mxu0 0.0
    %2407 = vmatpush1.xpose.msra.mxu0 0.0
    %2408 = vmatprep.subr.mxu0 0.0
    %2409 = vmatpush1.xpose.msra.mxu0 0.0
    %v2410 = vand.u32 %v1831, 4294901760
    %v2411 = vsub.f32 %v1831, %v2410
    %v2412 = vand.u32 %v2411, 4294901760
    %2413 = vmatprep.mubr.f32.mxu0 %v2412
    %v2414 = vand.u32 %v1830, 4294901760
    %v2415 = vsub.f32 %v1830, %v2414
    %v2416 = vand.u32 %v2415, 4294901760
    %2417 = vmatmul.mubr.f32.gmra.mrb[0].mxu0 %v2416
    %v2418 = vpop.f32.mrb[0].mxu0
    %v2419 = vadd.f32 %v2311, %v2418
    %v2420 = vpop.f32.mrb[0].mxu0
    %2421 = vdwg.mxu0
    %v2422 = vand.u32 %v50, 4294901760
    %v2423 = vsub.f32 %v50, %v2422
    %v2424 = vand.u32 %v2423, 4294901760
    %2425 = vmatprep.subr.mxu0 %v2424
    %v2426 = vand.u32 %v49, 4294901760
    %v2427 = vsub.f32 %v49, %v2426
    %v2428 = vand.u32 %v2427, 4294901760
    %2429 = vmatpush1.xpose.msra.mxu0 %v2428
    %v2430 = vand.u32 %v52, 4294901760
    %v2431 = vsub.f32 %v52, %v2430
    %v2432 = vand.u32 %v2431, 4294901760
    %2433 = vmatprep.subr.mxu0 %v2432
    %v2434 = vand.u32 %v51, 4294901760
    %v2435 = vsub.f32 %v51, %v2434
    %v2436 = vand.u32 %v2435, 4294901760
    %2437 = vmatpush1.xpose.msra.mxu0 %v2436
    %v2438 = vand.u32 %v54, 4294901760
    %v2439 = vsub.f32 %v54, %v2438
    %v2440 = vand.u32 %v2439, 4294901760
    %2441 = vmatprep.subr.mxu0 %v2440
    %v2442 = vand.u32 %v53, 4294901760
    %v2443 = vsub.f32 %v53, %v2442
    %v2444 = vand.u32 %v2443, 4294901760
    %2445 = vmatpush1.xpose.msra.mxu0 %v2444
    %v2446 = vand.u32 %v56, 4294901760
    %v2447 = vsub.f32 %v56, %v2446
    %v2448 = vand.u32 %v2447, 4294901760
    %2449 = vmatprep.subr.mxu0 %v2448
    %v2450 = vand.u32 %v55, 4294901760
    %v2451 = vsub.f32 %v55, %v2450
    %v2452 = vand.u32 %v2451, 4294901760
    %2453 = vmatpush1.xpose.msra.mxu0 %v2452
    %v2454 = vand.u32 %v58, 4294901760
    %v2455 = vsub.f32 %v58, %v2454
    %v2456 = vand.u32 %v2455, 4294901760
    %2457 = vmatprep.subr.mxu0 %v2456
    %v2458 = vand.u32 %v57, 4294901760
    %v2459 = vsub.f32 %v57, %v2458
    %v2460 = vand.u32 %v2459, 4294901760
    %2461 = vmatpush1.xpose.msra.mxu0 %v2460
    %v2462 = vand.u32 %v60, 4294901760
    %v2463 = vsub.f32 %v60, %v2462
    %v2464 = vand.u32 %v2463, 4294901760
    %2465 = vmatprep.subr.mxu0 %v2464
    %v2466 = vand.u32 %v59, 4294901760
    %v2467 = vsub.f32 %v59, %v2466
    %v2468 = vand.u32 %v2467, 4294901760
    %2469 = vmatpush1.xpose.msra.mxu0 %v2468
    %v2470 = vand.u32 %v62, 4294901760
    %v2471 = vsub.f32 %v62, %v2470
    %v2472 = vand.u32 %v2471, 4294901760
    %2473 = vmatprep.subr.mxu0 %v2472
    %v2474 = vand.u32 %v61, 4294901760
    %v2475 = vsub.f32 %v61, %v2474
    %v2476 = vand.u32 %v2475, 4294901760
    %2477 = vmatpush1.xpose.msra.mxu0 %v2476
    %v2478 = vand.u32 %v64, 4294901760
    %v2479 = vsub.f32 %v64, %v2478
    %v2480 = vand.u32 %v2479, 4294901760
    %2481 = vmatprep.subr.mxu0 %v2480
    %v2482 = vand.u32 %v63, 4294901760
    %v2483 = vsub.f32 %v63, %v2482
    %v2484 = vand.u32 %v2483, 4294901760
    %2485 = vmatpush1.xpose.msra.mxu0 %v2484
    %v2486 = vand.u32 %v66, 4294901760
    %v2487 = vsub.f32 %v66, %v2486
    %v2488 = vand.u32 %v2487, 4294901760
    %2489 = vmatprep.subr.mxu0 %v2488
    %v2490 = vand.u32 %v65, 4294901760
    %v2491 = vsub.f32 %v65, %v2490
    %v2492 = vand.u32 %v2491, 4294901760
    %2493 = vmatpush1.xpose.msra.mxu0 %v2492
    %v2494 = vand.u32 %v68, 4294901760
    %v2495 = vsub.f32 %v68, %v2494
    %v2496 = vand.u32 %v2495, 4294901760
    %2497 = vmatprep.subr.mxu0 %v2496
    %v2498 = vand.u32 %v67, 4294901760
    %v2499 = vsub.f32 %v67, %v2498
    %v2500 = vand.u32 %v2499, 4294901760
    %2501 = vmatpush1.xpose.msra.mxu0 %v2500
    %v2502 = vand.u32 %v70, 4294901760
    %v2503 = vsub.f32 %v70, %v2502
    %v2504 = vand.u32 %v2503, 4294901760
    %2505 = vmatprep.subr.mxu0 %v2504
    %v2506 = vand.u32 %v69, 4294901760
    %v2507 = vsub.f32 %v69, %v2506
    %v2508 = vand.u32 %v2507, 4294901760
    %2509 = vmatpush1.xpose.msra.mxu0 %v2508
    %v2510 = vand.u32 %v72, 4294901760
    %v2511 = vsub.f32 %v72, %v2510
    %v2512 = vand.u32 %v2511, 4294901760
    %2513 = vmatprep.subr.mxu0 %v2512
    %v2514 = vand.u32 %v71, 4294901760
    %v2515 = vsub.f32 %v71, %v2514
    %v2516 = vand.u32 %v2515, 4294901760
    %2517 = vmatpush1.xpose.msra.mxu0 %v2516
    %v2518 = vand.u32 %v74, 4294901760
    %v2519 = vsub.f32 %v74, %v2518
    %v2520 = vand.u32 %v2519, 4294901760
    %2521 = vmatprep.subr.mxu0 %v2520
    %v2522 = vand.u32 %v73, 4294901760
    %v2523 = vsub.f32 %v73, %v2522
    %v2524 = vand.u32 %v2523, 4294901760
    %2525 = vmatpush1.xpose.msra.mxu0 %v2524
    %v2526 = vand.u32 %v76, 4294901760
    %v2527 = vsub.f32 %v76, %v2526
    %v2528 = vand.u32 %v2527, 4294901760
    %2529 = vmatprep.subr.mxu0 %v2528
    %v2530 = vand.u32 %v75, 4294901760
    %v2531 = vsub.f32 %v75, %v2530
    %v2532 = vand.u32 %v2531, 4294901760
    %2533 = vmatpush1.xpose.msra.mxu0 %v2532
    %v2534 = vand.u32 %v78, 4294901760
    %v2535 = vsub.f32 %v78, %v2534
    %v2536 = vand.u32 %v2535, 4294901760
    %2537 = vmatprep.subr.mxu0 %v2536
    %v2538 = vand.u32 %v77, 4294901760
    %v2539 = vsub.f32 %v77, %v2538
    %v2540 = vand.u32 %v2539, 4294901760
    %2541 = vmatpush1.xpose.msra.mxu0 %v2540
    %v2542 = vand.u32 %v80, 4294901760
    %v2543 = vsub.f32 %v80, %v2542
    %v2544 = vand.u32 %v2543, 4294901760
    %2545 = vmatprep.subr.mxu0 %v2544
    %v2546 = vand.u32 %v79, 4294901760
    %v2547 = vsub.f32 %v79, %v2546
    %v2548 = vand.u32 %v2547, 4294901760
    %2549 = vmatpush1.xpose.msra.mxu0 %v2548
    %2550 = vmatprep.subr.mxu0 0.0
    %2551 = vmatpush1.xpose.msra.mxu0 0.0
    %2552 = vmatprep.subr.mxu0 0.0
    %2553 = vmatpush1.xpose.msra.mxu0 0.0
    %2554 = vmatprep.subr.mxu0 0.0
    %2555 = vmatpush1.xpose.msra.mxu0 0.0
    %2556 = vmatprep.subr.mxu0 0.0
    %2557 = vmatpush1.xpose.msra.mxu0 0.0
    %2558 = vmatprep.subr.mxu0 0.0
    %2559 = vmatpush1.xpose.msra.mxu0 0.0
    %2560 = vmatprep.subr.mxu0 0.0
    %2561 = vmatpush1.xpose.msra.mxu0 0.0
    %2562 = vmatprep.subr.mxu0 0.0
    %2563 = vmatpush1.xpose.msra.mxu0 0.0
    %2564 = vmatprep.subr.mxu0 0.0
    %2565 = vmatpush1.xpose.msra.mxu0 0.0
    %2566 = vmatprep.subr.mxu0 0.0
    %2567 = vmatpush1.xpose.msra.mxu0 0.0
    %2568 = vmatprep.subr.mxu0 0.0
    %2569 = vmatpush1.xpose.msra.mxu0 0.0
    %2570 = vmatprep.subr.mxu0 0.0
    %2571 = vmatpush1.xpose.msra.mxu0 0.0
    %2572 = vmatprep.subr.mxu0 0.0
    %2573 = vmatpush1.xpose.msra.mxu0 0.0
    %2574 = vmatprep.subr.mxu0 0.0
    %2575 = vmatpush1.xpose.msra.mxu0 0.0
    %2576 = vmatprep.subr.mxu0 0.0
    %2577 = vmatpush1.xpose.msra.mxu0 0.0
    %2578 = vmatprep.subr.mxu0 0.0
    %2579 = vmatpush1.xpose.msra.mxu0 0.0
    %2580 = vmatprep.subr.mxu0 0.0
    %2581 = vmatpush1.xpose.msra.mxu0 0.0
    %v2582 = vand.u32 %v1831, 4294901760
    %2583 = vmatprep.mubr.f32.mxu0 %v2582
    %v2584 = vand.u32 %v1830, 4294901760
    %2585 = vmatmul.mubr.f32.gmra.mrb[0].mxu0 %v2584
    %v2586 = vpop.f32.mrb[0].mxu0
    %v2587 = vadd.f32 %v2419, %v2586
    %v2588 = vpop.f32.mrb[0].mxu0
    %2589 = vdwg.mxu0
    %v2590 = vand.u32 %v50, 4294901760
    %2591 = vmatprep.subr.mxu0 %v2590
    %v2592 = vand.u32 %v49, 4294901760
    %2593 = vmatpush1.xpose.msra.mxu0 %v2592
    %v2594 = vand.u32 %v52, 4294901760
    %2595 = vmatprep.subr.mxu0 %v2594
    %v2596 = vand.u32 %v51, 4294901760
    %2597 = vmatpush1.xpose.msra.mxu0 %v2596
    %v2598 = vand.u32 %v54, 4294901760
    %2599 = vmatprep.subr.mxu0 %v2598
    %v2600 = vand.u32 %v53, 4294901760
    %2601 = vmatpush1.xpose.msra.mxu0 %v2600
    %v2602 = vand.u32 %v56, 4294901760
    %2603 = vmatprep.subr.mxu0 %v2602
    %v2604 = vand.u32 %v55, 4294901760
    %2605 = vmatpush1.xpose.msra.mxu0 %v2604
    %v2606 = vand.u32 %v58, 4294901760
    %2607 = vmatprep.subr.mxu0 %v2606
    %v2608 = vand.u32 %v57, 4294901760
    %2609 = vmatpush1.xpose.msra.mxu0 %v2608
    %v2610 = vand.u32 %v60, 4294901760
    %2611 = vmatprep.subr.mxu0 %v2610
    %v2612 = vand.u32 %v59, 4294901760
    %2613 = vmatpush1.xpose.msra.mxu0 %v2612
    %v2614 = vand.u32 %v62, 4294901760
    %2615 = vmatprep.subr.mxu0 %v2614
    %v2616 = vand.u32 %v61, 4294901760
    %2617 = vmatpush1.xpose.msra.mxu0 %v2616
    %v2618 = vand.u32 %v64, 4294901760
    %2619 = vmatprep.subr.mxu0 %v2618
    %v2620 = vand.u32 %v63, 4294901760
    %2621 = vmatpush1.xpose.msra.mxu0 %v2620
    %v2622 = vand.u32 %v66, 4294901760
    %2623 = vmatprep.subr.mxu0 %v2622
    %v2624 = vand.u32 %v65, 4294901760
    %2625 = vmatpush1.xpose.msra.mxu0 %v2624
    %v2626 = vand.u32 %v68, 4294901760
    %2627 = vmatprep.subr.mxu0 %v2626
    %v2628 = vand.u32 %v67, 4294901760
    %2629 = vmatpush1.xpose.msra.mxu0 %v2628
    %v2630 = vand.u32 %v70, 4294901760
    %2631 = vmatprep.subr.mxu0 %v2630
    %v2632 = vand.u32 %v69, 4294901760
    %2633 = vmatpush1.xpose.msra.mxu0 %v2632
    %v2634 = vand.u32 %v72, 4294901760
    %2635 = vmatprep.subr.mxu0 %v2634
    %v2636 = vand.u32 %v71, 4294901760
    %2637 = vmatpush1.xpose.msra.mxu0 %v2636
    %v2638 = vand.u32 %v74, 4294901760
    %2639 = vmatprep.subr.mxu0 %v2638
    %v2640 = vand.u32 %v73, 4294901760
    %2641 = vmatpush1.xpose.msra.mxu0 %v2640
    %v2642 = vand.u32 %v76, 4294901760
    %2643 = vmatprep.subr.mxu0 %v2642
    %v2644 = vand.u32 %v75, 4294901760
    %2645 = vmatpush1.xpose.msra.mxu0 %v2644
    %v2646 = vand.u32 %v78, 4294901760
    %2647 = vmatprep.subr.mxu0 %v2646
    %v2648 = vand.u32 %v77, 4294901760
    %2649 = vmatpush1.xpose.msra.mxu0 %v2648
    %v2650 = vand.u32 %v80, 4294901760
    %2651 = vmatprep.subr.mxu0 %v2650
    %v2652 = vand.u32 %v79, 4294901760
    %2653 = vmatpush1.xpose.msra.mxu0 %v2652
    %2654 = vmatprep.subr.mxu0 0.0
    %2655 = vmatpush1.xpose.msra.mxu0 0.0
    %2656 = vmatprep.subr.mxu0 0.0
    %2657 = vmatpush1.xpose.msra.mxu0 0.0
    %2658 = vmatprep.subr.mxu0 0.0
    %2659 = vmatpush1.xpose.msra.mxu0 0.0
    %2660 = vmatprep.subr.mxu0 0.0
    %2661 = vmatpush1.xpose.msra.mxu0 0.0
    %2662 = vmatprep.subr.mxu0 0.0
    %2663 = vmatpush1.xpose.msra.mxu0 0.0
    %2664 = vmatprep.subr.mxu0 0.0
    %2665 = vmatpush1.xpose.msra.mxu0 0.0
    %2666 = vmatprep.subr.mxu0 0.0
    %2667 = vmatpush1.xpose.msra.mxu0 0.0
    %2668 = vmatprep.subr.mxu0 0.0
    %2669 = vmatpush1.xpose.msra.mxu0 0.0
    %2670 = vmatprep.subr.mxu0 0.0
    %2671 = vmatpush1.xpose.msra.mxu0 0.0
    %2672 = vmatprep.subr.mxu0 0.0
    %2673 = vmatpush1.xpose.msra.mxu0 0.0
    %2674 = vmatprep.subr.mxu0 0.0
    %2675 = vmatpush1.xpose.msra.mxu0 0.0
    %2676 = vmatprep.subr.mxu0 0.0
    %2677 = vmatpush1.xpose.msra.mxu0 0.0
    %2678 = vmatprep.subr.mxu0 0.0
    %2679 = vmatpush1.xpose.msra.mxu0 0.0
    %2680 = vmatprep.subr.mxu0 0.0
    %2681 = vmatpush1.xpose.msra.mxu0 0.0
    %2682 = vmatprep.subr.mxu0 0.0
    %2683 = vmatpush1.xpose.msra.mxu0 0.0
    %2684 = vmatprep.subr.mxu0 0.0
    %2685 = vmatpush1.xpose.msra.mxu0 0.0
    %v2686 = vand.u32 %v1831, 4294901760
    %2687 = vmatprep.mubr.f32.mxu0 %v2686
    %v2688 = vand.u32 %v1830, 4294901760
    %2689 = vmatmul.mubr.f32.gmra.mrb[0].mxu0 %v2688
    %v2690 = vpop.f32.mrb[0].mxu0
    %v2691 = vadd.f32 %v2587, %v2690
    %v2692 = vpop.f32.mrb[0].mxu0
    %2693 = vdwg.mxu0
    %v2694 = vsub.f32 0.0, %v2691
    %v2695 = vmul.f32 %v2694, 1.442695
    %v2696 = vpow.pop %v2695
    %v2697 = vadd.f32 %v2696, 1.0
    %v2698 = vrcp.pop %v2697
    %2699 = vst [vmem:[#allocation7] sm:$0xff] %v1830
    %2700 = vst [vmem:[#allocation7 + $0x8] sm:$0xff] %v1831
    %2701 = vst [vmem:[#allocation8] sm:$0xff] %v2698
    // Predicated region
    $region26: #{tpu_custom_call.1} parent=1 // pred_check
      _
    $region27: #{tpu_custom_call.1} parent=1 // pred_check_branch
      %2703 = sbr.rel (0) target = $region29
    $region28: #{tpu_custom_call.1} parent=1 // pred_region
      %s2705 = ssub.s32 256, 256
      %2706 = vsyncadd [#allocation4], %s2705
      %s2708 = sshll.u32 [#allocation7], 4
      %s2709 = int_to_ptr.vmem [resolvable:$true] %s2708
      %2711 = dma.vmem_to_hbm [thread:$0]  %s2709, 256, %s4, [#allocation4]
    $region29: #{tpu_custom_call.1} parent=1 // pred_fallthru
      _
    // Predicated region
    $region30: #{tpu_custom_call.1} parent=1 // pred_check
      _
    $region31: #{tpu_custom_call.1} parent=1 // pred_check_branch
      %2713 = sbr.rel (0) target = $region33
    $region32: #{tpu_custom_call.1} parent=1 // pred_region
      %s2715 = ssub.s32 128, 128
      %2716 = vsyncadd [#allocation9], %s2715
      %s2718 = sshll.u32 [#allocation8], 4
      %s2719 = int_to_ptr.vmem [resolvable:$true] %s2718
      %2721 = dma.vmem_to_hbm [thread:$0]  %s2719, 128, %s5, [#allocation9]
    $region33: #{tpu_custom_call.1} parent=1 // pred_fallthru
      _
    // Predicated region
    $region34: #{tpu_custom_call.1} parent=1 // pred_check
      _
    $region35: #{tpu_custom_call.1} parent=1 // pred_check_branch
      %2723 = sbr.rel (0) target = $region37
    $region36: #{tpu_custom_call.1} parent=1 // pred_region
      %2724 = dma.done [#allocation4], 256
    $region37: #{tpu_custom_call.1} parent=1 // pred_fallthru
      _
    // Predicated region
    $region38: #{tpu_custom_call.1} parent=1 // pred_check
      _
    $region39: #{tpu_custom_call.1} parent=1 // pred_check_branch
      %2726 = sbr.rel (0) target = $region41
    $region40: #{tpu_custom_call.1} parent=1 // pred_region
      %2727 = dma.done [#allocation9], 128
    $region41: #{tpu_custom_call.1} parent=1 // pred_fallthru
      _
    %2728 = vsyncpa [#allocation3], 1
    %2729 = vsyncpa [#allocation6], 1
    %2730 = vsyncpa [#allocation4], 1
    %2731 = vsyncpa [#allocation9], 1

</llo_original>
